<compile_context>
chip_gen: v7x
topology: tpu7x:2x2x1
jax: 0.10.0
libtpu: 0.0.40
codegen_flags: <defaults>
</compile_context>

<pallas_src>
import jax
import jax.numpy as jnp
from jax.experimental import pallas as pl
from jax.experimental.pallas import tpu as pltpu

HIDDEN_SIZES = [512, 256, 128]
INPUT_SIZE = 28 * 28          # 784
OUTPUT_SIZE = 26
OUT_PAD = 128                 # lane-dense padded output width


def _round_up(x, m):
    return (x + m - 1) // m * m


def _mlp_kernel(x_ref,
                w1_ref, b1_ref,
                w2_ref, b2_ref,
                w3_ref, b3_ref,
                w4_ref, b4_ref,
                o_ref):
    # x tile: (TB, 784) bf16.  Weights: bf16, resident across grid steps (constant
    # index_map).  Biases: f32, added to the f32 MXU accumulator.  ReLU in f32,
    # then cast back to bf16 for the next MXU pass.
    x = x_ref[...]

    h1 = jnp.dot(x, w1_ref[...], preferred_element_type=jnp.float32) + b1_ref[...]
    h1 = jnp.maximum(h1, 0.0).astype(jnp.bfloat16)

    h2 = jnp.dot(h1, w2_ref[...], preferred_element_type=jnp.float32) + b2_ref[...]
    h2 = jnp.maximum(h2, 0.0).astype(jnp.bfloat16)

    h3 = jnp.dot(h2, w3_ref[...], preferred_element_type=jnp.float32) + b3_ref[...]
    h3 = jnp.maximum(h3, 0.0).astype(jnp.bfloat16)

    h4 = jnp.dot(h3, w4_ref[...], preferred_element_type=jnp.float32) + b4_ref[...]
    o_ref[...] = h4.astype(o_ref.dtype)          # (TB, 128) unmasked lane-dense store


def prepare_params(params):
    """One-time pad + cast of f32 (in, out)-layout params for the kernel.

    Call this ONCE at init (not per forward).  Returns bf16 weights with w4/b4
    N-padded 26 -> 128 (zero columns are a mathematical no-op) and f32 biases.
    """
    (w1, b1), (w2, b2), (w3, b3), (w4, b4) = params
    w4p = jnp.pad(w4, ((0, 0), (0, OUT_PAD - OUTPUT_SIZE))).astype(jnp.bfloat16)
    b4p = jnp.pad(b4, ((0, 0), (0, OUT_PAD - OUTPUT_SIZE))).astype(jnp.float32)
    return (w1.astype(jnp.bfloat16), b1.astype(jnp.float32),
            w2.astype(jnp.bfloat16), b2.astype(jnp.float32),
            w3.astype(jnp.bfloat16), b3.astype(jnp.float32),
            w4p, b4p)


def densenet_forward(x, prepared_params, *, tb=512):
    """x: (B, 1, 28, 28) or (B, 784). prepared_params: output of prepare_params.
    Returns (B, 26) float32 logits."""
    w1, b1, w2, b2, w3, b3, w4, b4 = prepared_params

    B = x.shape[0]
    x2d = x.reshape(B, -1)                                  # x.view(B, -1)

    TB = min(tb, _round_up(B, 16))                          # bf16 sublane packing: 16
    B_pad = _round_up(B, TB)
    if B_pad != B:
        x2d = jnp.pad(x2d, ((0, B_pad - B), (0, 0)))
    x_bf16 = x2d.astype(jnp.bfloat16)

    n_tiles = B_pad // TB

    def _const(i):            # weights/biases: same block every grid step -> resident
        return (0, 0)

    in_specs = [
        pl.BlockSpec((TB, INPUT_SIZE), lambda i: (i, 0)),   # last dim = full array dim
        pl.BlockSpec(w1.shape, _const), pl.BlockSpec(b1.shape, _const),
        pl.BlockSpec(w2.shape, _const), pl.BlockSpec(b2.shape, _const),
        pl.BlockSpec(w3.shape, _const), pl.BlockSpec(b3.shape, _const),
        pl.BlockSpec(w4.shape, _const), pl.BlockSpec(b4.shape, _const),
    ]
    out_specs = pl.BlockSpec((TB, OUT_PAD), lambda i: (i, 0))

    # Advisory cost estimate for XLA's scheduler (kernel-only; params are prepped once).
    mac = INPUT_SIZE * 512 + 512 * 256 + 256 * 128 + 128 * OUT_PAD
    weight_bytes = 2 * mac                                  # bf16 weights
    bias_bytes = 4 * (512 + 256 + 128 + OUT_PAD)
    io_bytes = B_pad * (INPUT_SIZE * 2 + OUT_PAD * 4)
    cost = pl.CostEstimate(flops=2 * B_pad * mac,
                           transcendentals=0,
                           bytes_accessed=weight_bytes + bias_bytes + io_bytes)

    # Megacore sharding duplicates the (dominant) weight DMA per TensorCore on v7x;
    # only worth it when there are enough batch tiles that compute dominates.
    semantics = ("parallel",) if n_tiles >= 4 else ("arbitrary",)

    out = pl.pallas_call(
        _mlp_kernel,
        out_shape=jax.ShapeDtypeStruct((B_pad, OUT_PAD), jnp.float32),
        grid_spec=pltpu.PrefetchScalarGridSpec(
            num_scalar_prefetch=0,
            grid=(n_tiles,),
            in_specs=in_specs,
            out_specs=out_specs,
        ),
        compiler_params=pltpu.CompilerParams(dimension_semantics=semantics),
        cost_estimate=cost,
    )(x_bf16, w1, b1, w2, b2, w3, b3, w4, b4)

    return out[:B, :OUTPUT_SIZE]


def init_params(key):
    """Deterministic init mimicking nn.Linear default (uniform +/- 1/sqrt(fan_in)).
    Weights stored as (in_features, out_features); biases as (1, out_features)."""
    dims = [INPUT_SIZE] + HIDDEN_SIZES + [OUTPUT_SIZE]
    params = []
    for i in range(4):
        fan_in, fan_out = dims[i], dims[i + 1]
        key, kw, kb = jax.random.split(key, 3)
        bound = 1.0 / jnp.sqrt(float(fan_in))
        w = jax.random.uniform(kw, (fan_in, fan_out), jnp.float32, -bound, bound)
        b = jax.random.uniform(kb, (1, fan_out), jnp.float32, -bound, bound)
        params.append((w, b))
    return params


def reference_forward(x, params):
    """Pure-JAX reference applying the same bf16 weight/activation quantization
    (f32 accumulation) the kernel uses.  Note: this deviates from a bit-exact
    f32 PyTorch forward by design (bf16 MXU path)."""
    B = x.shape[0]
    h = x.reshape(B, -1).astype(jnp.bfloat16)
    for i, (w, b) in enumerate(params):
        acc = jnp.dot(h, w.astype(jnp.bfloat16),
                      preferred_element_type=jnp.float32) + b.astype(jnp.float32)
        if i < 3:
            h = jnp.maximum(acc, 0.0).astype(jnp.bfloat16)
        else:
            h = acc
    return h


if __name__ == "__main__":
    key = jax.random.PRNGKey(0)
    k_params, k_x = jax.random.split(key)

    params = init_params(k_params)
    prepared = prepare_params(params)          # hoisted: runs once at init
    x = jax.random.normal(k_x, (8, 1, 28, 28), jnp.float32)   # batch=8, MNIST-like

    fwd = jax.jit(densenet_forward)
    out = jax.block_until_ready(fwd(x, prepared))

    ref = reference_forward(x, params)
    assert out.shape == (8, OUTPUT_SIZE)
    assert jnp.allclose(out, ref, atol=2e-2, rtol=2e-2), \
        float(jnp.max(jnp.abs(out - ref)))

    print("KERNEL_OK")
</pallas_src>

<mosaic_0001>
module attributes {stable_mosaic.version = 11 : i64} {
  func.func @_mlp_kernel(%arg0: i32, %arg1: memref<16x784xbf16, #tpu.memory_space<vmem>>, %arg2: memref<784x512xbf16, #tpu.memory_space<vmem>>, %arg3: memref<1x512xf32, #tpu.memory_space<vmem>>, %arg4: memref<512x256xbf16, #tpu.memory_space<vmem>>, %arg5: memref<1x256xf32, #tpu.memory_space<vmem>>, %arg6: memref<256x128xbf16, #tpu.memory_space<vmem>>, %arg7: memref<1x128xf32, #tpu.memory_space<vmem>>, %arg8: memref<128x128xbf16, #tpu.memory_space<vmem>>, %arg9: memref<1x128xf32, #tpu.memory_space<vmem>>, %arg10: memref<16x128xf32, #tpu.memory_space<vmem>>) attributes {dimension_semantics = [#tpu.dimension_semantics<arbitrary>], iteration_bounds = array<i64: 1>, scalar_prefetch = 0 : i64, scratch_operands = 0 : i64, tpu.core_type = #tpu.core_type<tc>, window_params = [{transform_indices = @transform_0, window_bounds = array<i64: 16, 784>}, {pipeline_mode = #tpu.pipeline_mode<synchronous>, transform_indices = @transform_1, window_bounds = array<i64: 784, 512>}, {pipeline_mode = #tpu.pipeline_mode<synchronous>, transform_indices = @transform_2, window_bounds = array<i64: 1, 512>}, {pipeline_mode = #tpu.pipeline_mode<synchronous>, transform_indices = @transform_3, window_bounds = array<i64: 512, 256>}, {pipeline_mode = #tpu.pipeline_mode<synchronous>, transform_indices = @transform_4, window_bounds = array<i64: 1, 256>}, {pipeline_mode = #tpu.pipeline_mode<synchronous>, transform_indices = @transform_5, window_bounds = array<i64: 256, 128>}, {pipeline_mode = #tpu.pipeline_mode<synchronous>, transform_indices = @transform_6, window_bounds = array<i64: 1, 128>}, {pipeline_mode = #tpu.pipeline_mode<synchronous>, transform_indices = @transform_7, window_bounds = array<i64: 128, 128>}, {pipeline_mode = #tpu.pipeline_mode<synchronous>, transform_indices = @transform_8, window_bounds = array<i64: 1, 128>}, {transform_indices = @transform_9, window_bounds = array<i64: 16, 128>}]} {
    %c0 = arith.constant 0 : index
    %c0_0 = arith.constant 0 : index
    %0 = vector.load %arg1[%c0, %c0_0] : memref<16x784xbf16, #tpu.memory_space<vmem>>, vector<16x784xbf16>
    %c0_1 = arith.constant 0 : index
    %c0_2 = arith.constant 0 : index
    %1 = vector.load %arg2[%c0_1, %c0_2] : memref<784x512xbf16, #tpu.memory_space<vmem>>, vector<784x512xbf16>
    %cst = arith.constant dense<0.000000e+00> : vector<16x512xf32>
    %2 = tpu.matmul %0, %1, %cst {dimension_numbers = #tpu.dot_dimension_numbers<[1], [0], [0], [1], [0, 0, 1, 1], [], []>} : vector<16x784xbf16>, vector<784x512xbf16>, vector<16x512xf32> -> vector<16x512xf32>
    %c0_3 = arith.constant 0 : index
    %c0_4 = arith.constant 0 : index
    %3 = vector.load %arg3[%c0_3, %c0_4] : memref<1x512xf32, #tpu.memory_space<vmem>>, vector<1x512xf32>
    %4 = vector.broadcast %3 : vector<1x512xf32> to vector<16x512xf32>
    %5 = arith.addf %2, %4 : vector<16x512xf32>
    %cst_5 = arith.constant 0.000000e+00 : f32
    %6 = vector.broadcast %cst_5 : f32 to vector<16x512xf32>
    %7 = arith.maximumf %5, %6 : vector<16x512xf32>
    %8 = arith.truncf %7 : vector<16x512xf32> to vector<16x512xbf16>
    %c0_6 = arith.constant 0 : index
    %c0_7 = arith.constant 0 : index
    %9 = vector.load %arg4[%c0_6, %c0_7] : memref<512x256xbf16, #tpu.memory_space<vmem>>, vector<512x256xbf16>
    %cst_8 = arith.constant dense<0.000000e+00> : vector<16x256xf32>
    %10 = tpu.matmul %8, %9, %cst_8 {dimension_numbers = #tpu.dot_dimension_numbers<[1], [0], [0], [1], [0, 0, 1, 1], [], []>} : vector<16x512xbf16>, vector<512x256xbf16>, vector<16x256xf32> -> vector<16x256xf32>
    %c0_9 = arith.constant 0 : index
    %c0_10 = arith.constant 0 : index
    %11 = vector.load %arg5[%c0_9, %c0_10] : memref<1x256xf32, #tpu.memory_space<vmem>>, vector<1x256xf32>
    %12 = vector.broadcast %11 : vector<1x256xf32> to vector<16x256xf32>
    %13 = arith.addf %10, %12 : vector<16x256xf32>
    %cst_11 = arith.constant 0.000000e+00 : f32
    %14 = vector.broadcast %cst_11 : f32 to vector<16x256xf32>
    %15 = arith.maximumf %13, %14 : vector<16x256xf32>
    %16 = arith.truncf %15 : vector<16x256xf32> to vector<16x256xbf16>
    %c0_12 = arith.constant 0 : index
    %c0_13 = arith.constant 0 : index
    %17 = vector.load %arg6[%c0_12, %c0_13] : memref<256x128xbf16, #tpu.memory_space<vmem>>, vector<256x128xbf16>
    %cst_14 = arith.constant dense<0.000000e+00> : vector<16x128xf32>
    %18 = tpu.matmul %16, %17, %cst_14 {dimension_numbers = #tpu.dot_dimension_numbers<[1], [0], [0], [1], [0, 0, 1, 1], [], []>} : vector<16x256xbf16>, vector<256x128xbf16>, vector<16x128xf32> -> vector<16x128xf32>
    %c0_15 = arith.constant 0 : index
    %c0_16 = arith.constant 0 : index
    %19 = vector.load %arg7[%c0_15, %c0_16] : memref<1x128xf32, #tpu.memory_space<vmem>>, vector<1x128xf32>
    %20 = vector.broadcast %19 : vector<1x128xf32> to vector<16x128xf32>
    %21 = arith.addf %18, %20 : vector<16x128xf32>
    %cst_17 = arith.constant 0.000000e+00 : f32
    %22 = vector.broadcast %cst_17 : f32 to vector<16x128xf32>
    %23 = arith.maximumf %21, %22 : vector<16x128xf32>
    %24 = arith.truncf %23 : vector<16x128xf32> to vector<16x128xbf16>
    %c0_18 = arith.constant 0 : index
    %c0_19 = arith.constant 0 : index
    %25 = vector.load %arg8[%c0_18, %c0_19] : memref<128x128xbf16, #tpu.memory_space<vmem>>, vector<128x128xbf16>
    %cst_20 = arith.constant dense<0.000000e+00> : vector<16x128xf32>
    %26 = tpu.matmul %24, %25, %cst_20 {dimension_numbers = #tpu.dot_dimension_numbers<[1], [0], [0], [1], [0, 0, 1, 1], [], []>} : vector<16x128xbf16>, vector<128x128xbf16>, vector<16x128xf32> -> vector<16x128xf32>
    %c0_21 = arith.constant 0 : index
    %c0_22 = arith.constant 0 : index
    %27 = vector.load %arg9[%c0_21, %c0_22] : memref<1x128xf32, #tpu.memory_space<vmem>>, vector<1x128xf32>
    %28 = vector.broadcast %27 : vector<1x128xf32> to vector<16x128xf32>
    %29 = arith.addf %26, %28 : vector<16x128xf32>
    %c0_23 = arith.constant 0 : index
    %c0_24 = arith.constant 0 : index
    %30 = vector.load %arg10[%c0_23, %c0_24] : memref<16x128xf32, #tpu.memory_space<vmem>>, vector<16x128xf32>
    tpu.vector_store %arg10[%c0_23, %c0_24], %29 {strides = array<i32>} : memref<16x128xf32, #tpu.memory_space<vmem>>, vector<16x128xf32>,
    return
  }
  func.func @transform_0(%arg0: i32) -> (i32, i32) {
    %c0_i32 = arith.constant 0 : i32
    %c0_i32_0 = arith.constant 0 : i32
    return %arg0, %c0_i32 : i32, i32
  }
  func.func @transform_1(%arg0: i32) -> (i32, i32) {
    %c0_i32 = arith.constant 0 : i32
    %c0_i32_0 = arith.constant 0 : i32
    %c0_i32_1 = arith.constant 0 : i32
    return %c0_i32, %c0_i32_0 : i32, i32
  }
  func.func @transform_2(%arg0: i32) -> (i32, i32) {
    %c0_i32 = arith.constant 0 : i32
    %c0_i32_0 = arith.constant 0 : i32
    %c0_i32_1 = arith.constant 0 : i32
    return %c0_i32, %c0_i32_0 : i32, i32
  }
  func.func @transform_3(%arg0: i32) -> (i32, i32) {
    %c0_i32 = arith.constant 0 : i32
    %c0_i32_0 = arith.constant 0 : i32
    %c0_i32_1 = arith.constant 0 : i32
    return %c0_i32, %c0_i32_0 : i32, i32
  }
  func.func @transform_4(%arg0: i32) -> (i32, i32) {
    %c0_i32 = arith.constant 0 : i32
    %c0_i32_0 = arith.constant 0 : i32
    %c0_i32_1 = arith.constant 0 : i32
    return %c0_i32, %c0_i32_0 : i32, i32
  }
  func.func @transform_5(%arg0: i32) -> (i32, i32) {
    %c0_i32 = arith.constant 0 : i32
    %c0_i32_0 = arith.constant 0 : i32
    %c0_i32_1 = arith.constant 0 : i32
    return %c0_i32, %c0_i32_0 : i32, i32
  }
  func.func @transform_6(%arg0: i32) -> (i32, i32) {
    %c0_i32 = arith.constant 0 : i32
    %c0_i32_0 = arith.constant 0 : i32
    %c0_i32_1 = arith.constant 0 : i32
    return %c0_i32, %c0_i32_0 : i32, i32
  }
  func.func @transform_7(%arg0: i32) -> (i32, i32) {
    %c0_i32 = arith.constant 0 : i32
    %c0_i32_0 = arith.constant 0 : i32
    %c0_i32_1 = arith.constant 0 : i32
    return %c0_i32, %c0_i32_0 : i32, i32
  }
  func.func @transform_8(%arg0: i32) -> (i32, i32) {
    %c0_i32 = arith.constant 0 : i32
    %c0_i32_0 = arith.constant 0 : i32
    %c0_i32_1 = arith.constant 0 : i32
    return %c0_i32, %c0_i32_0 : i32, i32
  }
  func.func @transform_9(%arg0: i32) -> (i32, i32) {
    %c0_i32 = arith.constant 0 : i32
    %c0_i32_0 = arith.constant 0 : i32
    return %arg0, %c0_i32 : i32, i32
  }
}

</mosaic_0001>

<llo_original>
// kernel: densenet_forward.1
$region0: #{densenet_forward.1}
  #allocation0 [shape = 'u32[]', space=smem, size = 0x4, offset = 0x4, fixed_abs, tag = 'smem constant byte address 0x4 - core index']
  #allocation1 [shape = 'u32[144,128]{1,0:T(1,128)}', space=vmem, size = 0x12000, scoped, tag = 'internal scratch']
  %s0 = inlined_call_operand.vmem [shape: bf16[16,784], index: 0, kind: input, shape index: {}]
  %s1 = inlined_call_operand.hbm [shape: bf16[784,512], index: 1, kind: input, shape index: {}]
  %s2 = inlined_call_operand.vmem [shape: f32[1,512], index: 2, kind: input, shape index: {}]
  %s3 = inlined_call_operand.vmem [shape: bf16[512,256], index: 3, kind: input, shape index: {}]
  %s4 = inlined_call_operand.vmem [shape: f32[1,256], index: 4, kind: input, shape index: {}]
  %s5 = inlined_call_operand.hbm [shape: bf16[256,128], index: 5, kind: input, shape index: {}]
  %s6 = inlined_call_operand.vmem [shape: f32[1,128], index: 6, kind: input, shape index: {}]
  %s7 = inlined_call_operand.vmem [shape: bf16[128,128], index: 7, kind: input, shape index: {}]
  %s8 = inlined_call_operand.vmem [shape: f32[1,128], index: 8, kind: input, shape index: {}]
  %s9 = inlined_call_operand.vmem [shape: f32[16,128], index: 9, kind: output, shape index: {}]
  %s10 = sld [smem:[#allocation0]]
  $region54: #{densenet_forward.1} parent=0
    _
  %s12 = ssub.s32 1, %s10
  %s13 = scalar_select 0, %s12, %s10
  $region1: #{densenet_forward.1} parent=0
    #allocation2 [shape = 'u8[802816]{0}', space=vmem, size = 0xc4000, scoped, tag = 'input window, operand 1, single buffered']
    #allocation3 [shape = 's32[1]{0}', space=sflag, size = 0x4, scoped, tag = 'scoped memory for densenet_forward.1']
    #allocation4 [shape = 'u8[65536]{0}', space=vmem, size = 0x10000, scoped, tag = 'input window, operand 5, single buffered']
    #allocation5 [shape = 's32[1]{0}', space=sflag, size = 0x4, scoped, tag = 'scoped memory for densenet_forward.1']
    %14 = vsyncpa [#allocation3], 0
    %15 = vsyncpa [#allocation5], 0
    // Predicated region
    $region2: #{densenet_forward.1} parent=1 // pred_check
      _
    $region3: #{densenet_forward.1} parent=1 // pred_check_branch
      %17 = sbr.rel (0) target = $region5
    $region4: #{densenet_forward.1} parent=1 // pred_region
      _
    $region5: #{densenet_forward.1} parent=1 // pred_fallthru
      _
    // Predicated region
    $region6: #{densenet_forward.1} parent=1 // pred_check
      _
    $region7: #{densenet_forward.1} parent=1 // pred_check_branch
      %19 = sbr.rel (0) target = $region9
    $region8: #{densenet_forward.1} parent=1 // pred_region
      %s21 = ssub.s32 25088, 25088
      %22 = vsyncadd [#allocation3], %s21
      %s23 = sshll.u32 [#allocation2], 4
      %s24 = int_to_ptr.vmem [resolvable:$true] %s23
      %29 = dma.hbm_to_vmem [thread:$0]  %s1, 25088, %s24, [#allocation3], 256, 256, 16
    $region9: #{densenet_forward.1} parent=1 // pred_fallthru
      _
    // Predicated region
    $region10: #{densenet_forward.1} parent=1 // pred_check
      _
    $region11: #{densenet_forward.1} parent=1 // pred_check_branch
      %31 = sbr.rel (0) target = $region13
    $region12: #{densenet_forward.1} parent=1 // pred_region
      _
    $region13: #{densenet_forward.1} parent=1 // pred_fallthru
      _
    // Predicated region
    $region14: #{densenet_forward.1} parent=1 // pred_check
      _
    $region15: #{densenet_forward.1} parent=1 // pred_check_branch
      %33 = sbr.rel (0) target = $region17
    $region16: #{densenet_forward.1} parent=1 // pred_region
      _
    $region17: #{densenet_forward.1} parent=1 // pred_fallthru
      _
    // Predicated region
    $region18: #{densenet_forward.1} parent=1 // pred_check
      _
    $region19: #{densenet_forward.1} parent=1 // pred_check_branch
      %35 = sbr.rel (0) target = $region21
    $region20: #{densenet_forward.1} parent=1 // pred_region
      _
    $region21: #{densenet_forward.1} parent=1 // pred_fallthru
      _
    // Predicated region
    $region22: #{densenet_forward.1} parent=1 // pred_check
      _
    $region23: #{densenet_forward.1} parent=1 // pred_check_branch
      %37 = sbr.rel (0) target = $region25
    $region24: #{densenet_forward.1} parent=1 // pred_region
      %s39 = ssub.s32 2048, 2048
      %40 = vsyncadd [#allocation5], %s39
      %s41 = sshll.u32 [#allocation4], 4
      %s42 = int_to_ptr.vmem [resolvable:$true] %s41
      %47 = dma.hbm_to_vmem [thread:$0]  %s5, 2048, %s42, [#allocation5], 64, 64, 4
    $region25: #{densenet_forward.1} parent=1 // pred_fallthru
      _
    // Predicated region
    $region26: #{densenet_forward.1} parent=1 // pred_check
      _
    $region27: #{densenet_forward.1} parent=1 // pred_check_branch
      %49 = sbr.rel (0) target = $region29
    $region28: #{densenet_forward.1} parent=1 // pred_region
      _
    $region29: #{densenet_forward.1} parent=1 // pred_fallthru
      _
    // Predicated region
    $region30: #{densenet_forward.1} parent=1 // pred_check
      _
    $region31: #{densenet_forward.1} parent=1 // pred_check_branch
      %51 = sbr.rel (0) target = $region33
    $region32: #{densenet_forward.1} parent=1 // pred_region
      _
    $region33: #{densenet_forward.1} parent=1 // pred_fallthru
      _
    // Predicated region
    $region34: #{densenet_forward.1} parent=1 // pred_check
      _
    $region35: #{densenet_forward.1} parent=1 // pred_check_branch
      %53 = sbr.rel (0) target = $region37
    $region36: #{densenet_forward.1} parent=1 // pred_region
      _
    $region37: #{densenet_forward.1} parent=1 // pred_fallthru
      _
    // Predicated region
    $region38: #{densenet_forward.1} parent=1 // pred_check
      _
    $region39: #{densenet_forward.1} parent=1 // pred_check_branch
      %55 = sbr.rel (0) target = $region41
    $region40: #{densenet_forward.1} parent=1 // pred_region
      %56 = dma.done [#allocation3], 25088
    $region41: #{densenet_forward.1} parent=1 // pred_fallthru
      _
    // Predicated region
    $region42: #{densenet_forward.1} parent=1 // pred_check
      _
    $region43: #{densenet_forward.1} parent=1 // pred_check_branch
      %58 = sbr.rel (0) target = $region45
    $region44: #{densenet_forward.1} parent=1 // pred_region
      %59 = dma.done [#allocation5], 2048
    $region45: #{densenet_forward.1} parent=1 // pred_fallthru
      _
    %v61 = vld [vmem:[%s0] sm:$0xff]
    %v62 = vld [vmem:[%s0 + $0x8] sm:$0xff]
    %v63 = vld [vmem:[%s0 + $0x10] sm:$0xff]
    %v64 = vld [vmem:[%s0 + $0x18] sm:$0xf]
    %v65 = vld [vmem:[%s0 + $0x1c] sm:$0xff]
    %v66 = vld [vmem:[%s0 + $0x24] sm:$0xff]
    %v67 = vld [vmem:[%s0 + $0x2c] sm:$0xff]
    %v68 = vld [vmem:[%s0 + $0x34] sm:$0xf]
    %v69 = vld [vmem:[#allocation2] sm:$0xff]
    %v70 = vld [vmem:[#allocation2 + $0x8] sm:$0xff]
    %v71 = vld [vmem:[#allocation2 + $0x10] sm:$0xff]
    %v72 = vld [vmem:[#allocation2 + $0x18] sm:$0xff]
    %v73 = vld [vmem:[#allocation2 + $0x20] sm:$0xff]
    %v74 = vld [vmem:[#allocation2 + $0x28] sm:$0xff]
    %v75 = vld [vmem:[#allocation2 + $0x30] sm:$0xff]
    %v76 = vld [vmem:[#allocation2 + $0x38] sm:$0xff]
    %v77 = vld [vmem:[#allocation2 + $0x40] sm:$0xff]
    %v78 = vld [vmem:[#allocation2 + $0x48] sm:$0xff]
    %v79 = vld [vmem:[#allocation2 + $0x50] sm:$0xff]
    %v80 = vld [vmem:[#allocation2 + $0x58] sm:$0xff]
    %v81 = vld [vmem:[#allocation2 + $0x60] sm:$0xff]
    %v82 = vld [vmem:[#allocation2 + $0x68] sm:$0xff]
    %v83 = vld [vmem:[#allocation2 + $0x70] sm:$0xff]
    %v84 = vld [vmem:[#allocation2 + $0x78] sm:$0xff]
    %v85 = vld [vmem:[#allocation2 + $0x80] sm:$0xff]
    %v86 = vld [vmem:[#allocation2 + $0x88] sm:$0xff]
    %v87 = vld [vmem:[#allocation2 + $0x90] sm:$0xff]
    %v88 = vld [vmem:[#allocation2 + $0x98] sm:$0xff]
    %v89 = vld [vmem:[#allocation2 + $0xa0] sm:$0xff]
    %v90 = vld [vmem:[#allocation2 + $0xa8] sm:$0xff]
    %v91 = vld [vmem:[#allocation2 + $0xb0] sm:$0xff]
    %v92 = vld [vmem:[#allocation2 + $0xb8] sm:$0xff]
    %v93 = vld [vmem:[#allocation2 + $0xc0] sm:$0xff]
    %v94 = vld [vmem:[#allocation2 + $0xc8] sm:$0xff]
    %v95 = vld [vmem:[#allocation2 + $0xd0] sm:$0xff]
    %v96 = vld [vmem:[#allocation2 + $0xd8] sm:$0xff]
    %v97 = vld [vmem:[#allocation2 + $0xe0] sm:$0xff]
    %v98 = vld [vmem:[#allocation2 + $0xe8] sm:$0xff]
    %v99 = vld [vmem:[#allocation2 + $0xf0] sm:$0xff]
    %v100 = vld [vmem:[#allocation2 + $0xf8] sm:$0xff]
    %v101 = vld [vmem:[#allocation2 + $0x100] sm:$0xff]
    %v102 = vld [vmem:[#allocation2 + $0x108] sm:$0xff]
    %v103 = vld [vmem:[#allocation2 + $0x110] sm:$0xff]
    %v104 = vld [vmem:[#allocation2 + $0x118] sm:$0xff]
    %v105 = vld [vmem:[#allocation2 + $0x120] sm:$0xff]
    %v106 = vld [vmem:[#allocation2 + $0x128] sm:$0xff]
    %v107 = vld [vmem:[#allocation2 + $0x130] sm:$0xff]
    %v108 = vld [vmem:[#allocation2 + $0x138] sm:$0xff]
    %v109 = vld [vmem:[#allocation2 + $0x140] sm:$0xff]
    %v110 = vld [vmem:[#allocation2 + $0x148] sm:$0xff]
    %v111 = vld [vmem:[#allocation2 + $0x150] sm:$0xff]
    %v112 = vld [vmem:[#allocation2 + $0x158] sm:$0xff]
    %v113 = vld [vmem:[#allocation2 + $0x160] sm:$0xff]
    %v114 = vld [vmem:[#allocation2 + $0x168] sm:$0xff]
    %v115 = vld [vmem:[#allocation2 + $0x170] sm:$0xff]
    %v116 = vld [vmem:[#allocation2 + $0x178] sm:$0xff]
    %v117 = vld [vmem:[#allocation2 + $0x180] sm:$0xff]
    %v118 = vld [vmem:[#allocation2 + $0x188] sm:$0xff]
    %v119 = vld [vmem:[#allocation2 + $0x190] sm:$0xff]
    %v120 = vld [vmem:[#allocation2 + $0x198] sm:$0xff]
    %v121 = vld [vmem:[#allocation2 + $0x1a0] sm:$0xff]
    %v122 = vld [vmem:[#allocation2 + $0x1a8] sm:$0xff]
    %v123 = vld [vmem:[#allocation2 + $0x1b0] sm:$0xff]
    %v124 = vld [vmem:[#allocation2 + $0x1b8] sm:$0xff]
    %v125 = vld [vmem:[#allocation2 + $0x1c0] sm:$0xff]
    %v126 = vld [vmem:[#allocation2 + $0x1c8] sm:$0xff]
    %v127 = vld [vmem:[#allocation2 + $0x1d0] sm:$0xff]
    %v128 = vld [vmem:[#allocation2 + $0x1d8] sm:$0xff]
    %v129 = vld [vmem:[#allocation2 + $0x1e0] sm:$0xff]
    %v130 = vld [vmem:[#allocation2 + $0x1e8] sm:$0xff]
    %v131 = vld [vmem:[#allocation2 + $0x1f0] sm:$0xff]
    %v132 = vld [vmem:[#allocation2 + $0x1f8] sm:$0xff]
    %v133 = vld [vmem:[#allocation2 + $0x200] sm:$0xff]
    %v134 = vld [vmem:[#allocation2 + $0x208] sm:$0xff]
    %v135 = vld [vmem:[#allocation2 + $0x210] sm:$0xff]
    %v136 = vld [vmem:[#allocation2 + $0x218] sm:$0xff]
    %v137 = vld [vmem:[#allocation2 + $0x220] sm:$0xff]
    %v138 = vld [vmem:[#allocation2 + $0x228] sm:$0xff]
    %v139 = vld [vmem:[#allocation2 + $0x230] sm:$0xff]
    %v140 = vld [vmem:[#allocation2 + $0x238] sm:$0xff]
    %v141 = vld [vmem:[#allocation2 + $0x240] sm:$0xff]
    %v142 = vld [vmem:[#allocation2 + $0x248] sm:$0xff]
    %v143 = vld [vmem:[#allocation2 + $0x250] sm:$0xff]
    %v144 = vld [vmem:[#allocation2 + $0x258] sm:$0xff]
    %v145 = vld [vmem:[#allocation2 + $0x260] sm:$0xff]
    %v146 = vld [vmem:[#allocation2 + $0x268] sm:$0xff]
    %v147 = vld [vmem:[#allocation2 + $0x270] sm:$0xff]
    %v148 = vld [vmem:[#allocation2 + $0x278] sm:$0xff]
    %v149 = vld [vmem:[#allocation2 + $0x280] sm:$0xff]
    %v150 = vld [vmem:[#allocation2 + $0x288] sm:$0xff]
    %v151 = vld [vmem:[#allocation2 + $0x290] sm:$0xff]
    %v152 = vld [vmem:[#allocation2 + $0x298] sm:$0xff]
    %v153 = vld [vmem:[#allocation2 + $0x2a0] sm:$0xff]
    %v154 = vld [vmem:[#allocation2 + $0x2a8] sm:$0xff]
    %v155 = vld [vmem:[#allocation2 + $0x2b0] sm:$0xff]
    %v156 = vld [vmem:[#allocation2 + $0x2b8] sm:$0xff]
    %v157 = vld [vmem:[#allocation2 + $0x2c0] sm:$0xff]
    %v158 = vld [vmem:[#allocation2 + $0x2c8] sm:$0xff]
    %v159 = vld [vmem:[#allocation2 + $0x2d0] sm:$0xff]
    %v160 = vld [vmem:[#allocation2 + $0x2d8] sm:$0xff]
    %v161 = vld [vmem:[#allocation2 + $0x2e0] sm:$0xff]
    %v162 = vld [vmem:[#allocation2 + $0x2e8] sm:$0xff]
    %v163 = vld [vmem:[#allocation2 + $0x2f0] sm:$0xff]
    %v164 = vld [vmem:[#allocation2 + $0x2f8] sm:$0xff]
    %v165 = vld [vmem:[#allocation2 + $0x300] sm:$0xff]
    %v166 = vld [vmem:[#allocation2 + $0x308] sm:$0xff]
    %v167 = vld [vmem:[#allocation2 + $0x310] sm:$0xff]
    %v168 = vld [vmem:[#allocation2 + $0x318] sm:$0xff]
    %v169 = vld [vmem:[#allocation2 + $0x320] sm:$0xff]
    %v170 = vld [vmem:[#allocation2 + $0x328] sm:$0xff]
    %v171 = vld [vmem:[#allocation2 + $0x330] sm:$0xff]
    %v172 = vld [vmem:[#allocation2 + $0x338] sm:$0xff]
    %v173 = vld [vmem:[#allocation2 + $0x340] sm:$0xff]
    %v174 = vld [vmem:[#allocation2 + $0x348] sm:$0xff]
    %v175 = vld [vmem:[#allocation2 + $0x350] sm:$0xff]
    %v176 = vld [vmem:[#allocation2 + $0x358] sm:$0xff]
    %v177 = vld [vmem:[#allocation2 + $0x360] sm:$0xff]
    %v178 = vld [vmem:[#allocation2 + $0x368] sm:$0xff]
    %v179 = vld [vmem:[#allocation2 + $0x370] sm:$0xff]
    %v180 = vld [vmem:[#allocation2 + $0x378] sm:$0xff]
    %v181 = vld [vmem:[#allocation2 + $0x380] sm:$0xff]
    %v182 = vld [vmem:[#allocation2 + $0x388] sm:$0xff]
    %v183 = vld [vmem:[#allocation2 + $0x390] sm:$0xff]
    %v184 = vld [vmem:[#allocation2 + $0x398] sm:$0xff]
    %v185 = vld [vmem:[#allocation2 + $0x3a0] sm:$0xff]
    %v186 = vld [vmem:[#allocation2 + $0x3a8] sm:$0xff]
    %v187 = vld [vmem:[#allocation2 + $0x3b0] sm:$0xff]
    %v188 = vld [vmem:[#allocation2 + $0x3b8] sm:$0xff]
    %v189 = vld [vmem:[#allocation2 + $0x3c0] sm:$0xff]
    %v190 = vld [vmem:[#allocation2 + $0x3c8] sm:$0xff]
    %v191 = vld [vmem:[#allocation2 + $0x3d0] sm:$0xff]
    %v192 = vld [vmem:[#allocation2 + $0x3d8] sm:$0xff]
    %v193 = vld [vmem:[#allocation2 + $0x3e0] sm:$0xff]
    %v194 = vld [vmem:[#allocation2 + $0x3e8] sm:$0xff]
    %v195 = vld [vmem:[#allocation2 + $0x3f0] sm:$0xff]
    %v196 = vld [vmem:[#allocation2 + $0x3f8] sm:$0xff]
    %v197 = vld [vmem:[#allocation2 + $0x400] sm:$0xff]
    %v198 = vld [vmem:[#allocation2 + $0x408] sm:$0xff]
    %v199 = vld [vmem:[#allocation2 + $0x410] sm:$0xff]
    %v200 = vld [vmem:[#allocation2 + $0x418] sm:$0xff]
    %v201 = vld [vmem:[#allocation2 + $0x420] sm:$0xff]
    %v202 = vld [vmem:[#allocation2 + $0x428] sm:$0xff]
    %v203 = vld [vmem:[#allocation2 + $0x430] sm:$0xff]
    %v204 = vld [vmem:[#allocation2 + $0x438] sm:$0xff]
    %v205 = vld [vmem:[#allocation2 + $0x440] sm:$0xff]
    %v206 = vld [vmem:[#allocation2 + $0x448] sm:$0xff]
    %v207 = vld [vmem:[#allocation2 + $0x450] sm:$0xff]
    %v208 = vld [vmem:[#allocation2 + $0x458] sm:$0xff]
    %v209 = vld [vmem:[#allocation2 + $0x460] sm:$0xff]
    %v210 = vld [vmem:[#allocation2 + $0x468] sm:$0xff]
    %v211 = vld [vmem:[#allocation2 + $0x470] sm:$0xff]
    %v212 = vld [vmem:[#allocation2 + $0x478] sm:$0xff]
    %v213 = vld [vmem:[#allocation2 + $0x480] sm:$0xff]
    %v214 = vld [vmem:[#allocation2 + $0x488] sm:$0xff]
    %v215 = vld [vmem:[#allocation2 + $0x490] sm:$0xff]
    %v216 = vld [vmem:[#allocation2 + $0x498] sm:$0xff]
    %v217 = vld [vmem:[#allocation2 + $0x4a0] sm:$0xff]
    %v218 = vld [vmem:[#allocation2 + $0x4a8] sm:$0xff]
    %v219 = vld [vmem:[#allocation2 + $0x4b0] sm:$0xff]
    %v220 = vld [vmem:[#allocation2 + $0x4b8] sm:$0xff]
    %v221 = vld [vmem:[#allocation2 + $0x4c0] sm:$0xff]
    %v222 = vld [vmem:[#allocation2 + $0x4c8] sm:$0xff]
    %v223 = vld [vmem:[#allocation2 + $0x4d0] sm:$0xff]
    %v224 = vld [vmem:[#allocation2 + $0x4d8] sm:$0xff]
    %v225 = vld [vmem:[#allocation2 + $0x4e0] sm:$0xff]
    %v226 = vld [vmem:[#allocation2 + $0x4e8] sm:$0xff]
    %v227 = vld [vmem:[#allocation2 + $0x4f0] sm:$0xff]
    %v228 = vld [vmem:[#allocation2 + $0x4f8] sm:$0xff]
    %v229 = vld [vmem:[#allocation2 + $0x500] sm:$0xff]
    %v230 = vld [vmem:[#allocation2 + $0x508] sm:$0xff]
    %v231 = vld [vmem:[#allocation2 + $0x510] sm:$0xff]
    %v232 = vld [vmem:[#allocation2 + $0x518] sm:$0xff]
    %v233 = vld [vmem:[#allocation2 + $0x520] sm:$0xff]
    %v234 = vld [vmem:[#allocation2 + $0x528] sm:$0xff]
    %v235 = vld [vmem:[#allocation2 + $0x530] sm:$0xff]
    %v236 = vld [vmem:[#allocation2 + $0x538] sm:$0xff]
    %v237 = vld [vmem:[#allocation2 + $0x540] sm:$0xff]
    %v238 = vld [vmem:[#allocation2 + $0x548] sm:$0xff]
    %v239 = vld [vmem:[#allocation2 + $0x550] sm:$0xff]
    %v240 = vld [vmem:[#allocation2 + $0x558] sm:$0xff]
    %v241 = vld [vmem:[#allocation2 + $0x560] sm:$0xff]
    %v242 = vld [vmem:[#allocation2 + $0x568] sm:$0xff]
    %v243 = vld [vmem:[#allocation2 + $0x570] sm:$0xff]
    %v244 = vld [vmem:[#allocation2 + $0x578] sm:$0xff]
    %v245 = vld [vmem:[#allocation2 + $0x580] sm:$0xff]
    %v246 = vld [vmem:[#allocation2 + $0x588] sm:$0xff]
    %v247 = vld [vmem:[#allocation2 + $0x590] sm:$0xff]
    %v248 = vld [vmem:[#allocation2 + $0x598] sm:$0xff]
    %v249 = vld [vmem:[#allocation2 + $0x5a0] sm:$0xff]
    %v250 = vld [vmem:[#allocation2 + $0x5a8] sm:$0xff]
    %v251 = vld [vmem:[#allocation2 + $0x5b0] sm:$0xff]
    %v252 = vld [vmem:[#allocation2 + $0x5b8] sm:$0xff]
    %v253 = vld [vmem:[#allocation2 + $0x5c0] sm:$0xff]
    %v254 = vld [vmem:[#allocation2 + $0x5c8] sm:$0xff]
    %v255 = vld [vmem:[#allocation2 + $0x5d0] sm:$0xff]
    %v256 = vld [vmem:[#allocation2 + $0x5d8] sm:$0xff]
    %v257 = vld [vmem:[#allocation2 + $0x5e0] sm:$0xff]
    %v258 = vld [vmem:[#allocation2 + $0x5e8] sm:$0xff]
    %v259 = vld [vmem:[#allocation2 + $0x5f0] sm:$0xff]
    %v260 = vld [vmem:[#allocation2 + $0x5f8] sm:$0xff]
    %v261 = vld [vmem:[#allocation2 + $0x600] sm:$0xff]
    %v262 = vld [vmem:[#allocation2 + $0x608] sm:$0xff]
    %v263 = vld [vmem:[#allocation2 + $0x610] sm:$0xff]
    %v264 = vld [vmem:[#allocation2 + $0x618] sm:$0xff]
    %v265 = vld [vmem:[%s2] sm:$0xf]
    %v267 = vlaneseq
    %v268 = vshrl.u32 %v267, 7
    %v269 = vsub.s32 0, %v268
    %v270 = vrot.slane %v265, %v269
    %v271 = vlaneseq
    %v272 = vshrl.u32 %v271, 7
    %v273 = vsub.s32 1, %v272
    %v274 = vrot.slane %v265, %v273
    %v275 = vlaneseq
    %v276 = vshrl.u32 %v275, 7
    %v277 = vsub.s32 2, %v276
    %v278 = vrot.slane %v265, %v277
    %v279 = vlaneseq
    %v280 = vshrl.u32 %v279, 7
    %v281 = vsub.s32 3, %v280
    %v282 = vrot.slane %v265, %v281
    %v295 = vunpack.c.l.b16 %v61
    %v296 = vunpack.c.h.b16 %v61
    %v297 = vunpack.c.l.b16 %v62
    %v298 = vunpack.c.h.b16 %v62
    %v299 = vunpack.c.l.b16 %v63
    %v300 = vunpack.c.h.b16 %v63
    %v301 = vunpack.c.l.b16 %v64
    %v302 = vunpack.c.l.b16 %v65
    %v303 = vunpack.c.h.b16 %v65
    %v304 = vunpack.c.l.b16 %v66
    %v305 = vunpack.c.h.b16 %v66
    %v306 = vunpack.c.l.b16 %v67
    %v307 = vunpack.c.h.b16 %v67
    %v308 = vunpack.c.l.b16 %v68
    %v309 = vpack.c.b16 %v302, %v295
    %v310 = vpack.c.b16 %v303, %v296
    %v311 = vpack.c.b16 %v304, %v297
    %v312 = vpack.c.b16 %v305, %v298
    %v313 = vpack.c.b16 %v306, %v299
    %v314 = vpack.c.b16 %v307, %v300
    %v315 = vpack.c.b16 %v308, %v301
    %v518 = vunpack.c.l.b16 %v69
    %v519 = vunpack.c.h.b16 %v69
    %v520 = vunpack.c.l.b16 %v70
    %v521 = vunpack.c.h.b16 %v70
    %v522 = vunpack.c.l.b16 %v71
    %v523 = vunpack.c.h.b16 %v71
    %v524 = vunpack.c.l.b16 %v72
    %v525 = vunpack.c.h.b16 %v72
    %v526 = vunpack.c.l.b16 %v73
    %v527 = vunpack.c.h.b16 %v73
    %v528 = vunpack.c.l.b16 %v74
    %v529 = vunpack.c.h.b16 %v74
    %v530 = vunpack.c.l.b16 %v75
    %v531 = vunpack.c.h.b16 %v75
    %v532 = vunpack.c.l.b16 %v76
    %v533 = vunpack.c.h.b16 %v76
    %v534 = vunpack.c.l.b16 %v77
    %v535 = vunpack.c.h.b16 %v77
    %v536 = vunpack.c.l.b16 %v78
    %v537 = vunpack.c.h.b16 %v78
    %v538 = vunpack.c.l.b16 %v79
    %v539 = vunpack.c.h.b16 %v79
    %v540 = vunpack.c.l.b16 %v80
    %v541 = vunpack.c.h.b16 %v80
    %v542 = vunpack.c.l.b16 %v81
    %v543 = vunpack.c.h.b16 %v81
    %v544 = vunpack.c.l.b16 %v82
    %v545 = vunpack.c.h.b16 %v82
    %v546 = vunpack.c.l.b16 %v83
    %v547 = vunpack.c.h.b16 %v83
    %v548 = vunpack.c.l.b16 %v84
    %v549 = vunpack.c.h.b16 %v84
    %v550 = vunpack.c.l.b16 %v85
    %v551 = vunpack.c.h.b16 %v85
    %v552 = vunpack.c.l.b16 %v86
    %v553 = vunpack.c.h.b16 %v86
    %v554 = vunpack.c.l.b16 %v87
    %v555 = vunpack.c.h.b16 %v87
    %v556 = vunpack.c.l.b16 %v88
    %v557 = vunpack.c.h.b16 %v88
    %v558 = vunpack.c.l.b16 %v89
    %v559 = vunpack.c.h.b16 %v89
    %v560 = vunpack.c.l.b16 %v90
    %v561 = vunpack.c.h.b16 %v90
    %v562 = vunpack.c.l.b16 %v91
    %v563 = vunpack.c.h.b16 %v91
    %v564 = vunpack.c.l.b16 %v92
    %v565 = vunpack.c.h.b16 %v92
    %v566 = vunpack.c.l.b16 %v93
    %v567 = vunpack.c.h.b16 %v93
    %v568 = vunpack.c.l.b16 %v94
    %v569 = vunpack.c.h.b16 %v94
    %v570 = vunpack.c.l.b16 %v95
    %v571 = vunpack.c.h.b16 %v95
    %v572 = vunpack.c.l.b16 %v96
    %v573 = vunpack.c.h.b16 %v96
    %v574 = vunpack.c.l.b16 %v97
    %v575 = vunpack.c.h.b16 %v97
    %v576 = vunpack.c.l.b16 %v98
    %v577 = vunpack.c.h.b16 %v98
    %v578 = vunpack.c.l.b16 %v99
    %v579 = vunpack.c.h.b16 %v99
    %v580 = vunpack.c.l.b16 %v100
    %v581 = vunpack.c.h.b16 %v100
    %v582 = vunpack.c.l.b16 %v101
    %v583 = vunpack.c.h.b16 %v101
    %v584 = vunpack.c.l.b16 %v102
    %v585 = vunpack.c.h.b16 %v102
    %v586 = vunpack.c.l.b16 %v103
    %v587 = vunpack.c.h.b16 %v103
    %v588 = vunpack.c.l.b16 %v104
    %v589 = vunpack.c.h.b16 %v104
    %v590 = vunpack.c.l.b16 %v105
    %v591 = vunpack.c.h.b16 %v105
    %v592 = vunpack.c.l.b16 %v106
    %v593 = vunpack.c.h.b16 %v106
    %v594 = vunpack.c.l.b16 %v107
    %v595 = vunpack.c.h.b16 %v107
    %v596 = vunpack.c.l.b16 %v108
    %v597 = vunpack.c.h.b16 %v108
    %v598 = vunpack.c.l.b16 %v109
    %v599 = vunpack.c.h.b16 %v109
    %v600 = vunpack.c.l.b16 %v110
    %v601 = vunpack.c.h.b16 %v110
    %v602 = vunpack.c.l.b16 %v111
    %v603 = vunpack.c.h.b16 %v111
    %v604 = vunpack.c.l.b16 %v112
    %v605 = vunpack.c.h.b16 %v112
    %v606 = vunpack.c.l.b16 %v113
    %v607 = vunpack.c.h.b16 %v113
    %v608 = vunpack.c.l.b16 %v114
    %v609 = vunpack.c.h.b16 %v114
    %v610 = vunpack.c.l.b16 %v115
    %v611 = vunpack.c.h.b16 %v115
    %v612 = vunpack.c.l.b16 %v116
    %v613 = vunpack.c.h.b16 %v116
    %v614 = vunpack.c.l.b16 %v117
    %v615 = vunpack.c.h.b16 %v117
    %v616 = vunpack.c.l.b16 %v118
    %v617 = vunpack.c.h.b16 %v118
    %v618 = vunpack.c.l.b16 %v119
    %v619 = vunpack.c.h.b16 %v119
    %v620 = vunpack.c.l.b16 %v120
    %v621 = vunpack.c.h.b16 %v120
    %v622 = vunpack.c.l.b16 %v121
    %v623 = vunpack.c.h.b16 %v121
    %v624 = vunpack.c.l.b16 %v122
    %v625 = vunpack.c.h.b16 %v122
    %v626 = vunpack.c.l.b16 %v123
    %v627 = vunpack.c.h.b16 %v123
    %v628 = vunpack.c.l.b16 %v124
    %v629 = vunpack.c.h.b16 %v124
    %v630 = vunpack.c.l.b16 %v125
    %v631 = vunpack.c.h.b16 %v125
    %v632 = vunpack.c.l.b16 %v126
    %v633 = vunpack.c.h.b16 %v126
    %v634 = vunpack.c.l.b16 %v127
    %v635 = vunpack.c.h.b16 %v127
    %v636 = vunpack.c.l.b16 %v128
    %v637 = vunpack.c.h.b16 %v128
    %v638 = vunpack.c.l.b16 %v129
    %v639 = vunpack.c.h.b16 %v129
    %v640 = vunpack.c.l.b16 %v130
    %v641 = vunpack.c.h.b16 %v130
    %v642 = vunpack.c.l.b16 %v131
    %v643 = vunpack.c.h.b16 %v131
    %v644 = vunpack.c.l.b16 %v132
    %v645 = vunpack.c.h.b16 %v132
    %v646 = vunpack.c.l.b16 %v133
    %v647 = vunpack.c.h.b16 %v133
    %v648 = vunpack.c.l.b16 %v134
    %v649 = vunpack.c.h.b16 %v134
    %v650 = vunpack.c.l.b16 %v135
    %v651 = vunpack.c.h.b16 %v135
    %v652 = vunpack.c.l.b16 %v136
    %v653 = vunpack.c.h.b16 %v136
    %v654 = vunpack.c.l.b16 %v137
    %v655 = vunpack.c.h.b16 %v137
    %v656 = vunpack.c.l.b16 %v138
    %v657 = vunpack.c.h.b16 %v138
    %v658 = vunpack.c.l.b16 %v139
    %v659 = vunpack.c.h.b16 %v139
    %v660 = vunpack.c.l.b16 %v140
    %v661 = vunpack.c.h.b16 %v140
    %v662 = vunpack.c.l.b16 %v141
    %v663 = vunpack.c.h.b16 %v141
    %v664 = vunpack.c.l.b16 %v142
    %v665 = vunpack.c.h.b16 %v142
    %v666 = vunpack.c.l.b16 %v143
    %v667 = vunpack.c.h.b16 %v143
    %v668 = vunpack.c.l.b16 %v144
    %v669 = vunpack.c.h.b16 %v144
    %v670 = vunpack.c.l.b16 %v145
    %v671 = vunpack.c.h.b16 %v145
    %v672 = vunpack.c.l.b16 %v146
    %v673 = vunpack.c.h.b16 %v146
    %v674 = vunpack.c.l.b16 %v147
    %v675 = vunpack.c.h.b16 %v147
    %v676 = vunpack.c.l.b16 %v148
    %v677 = vunpack.c.h.b16 %v148
    %v678 = vunpack.c.l.b16 %v149
    %v679 = vunpack.c.h.b16 %v149
    %v680 = vunpack.c.l.b16 %v150
    %v681 = vunpack.c.h.b16 %v150
    %v682 = vunpack.c.l.b16 %v151
    %v683 = vunpack.c.h.b16 %v151
    %v684 = vunpack.c.l.b16 %v152
    %v685 = vunpack.c.h.b16 %v152
    %v686 = vunpack.c.l.b16 %v153
    %v687 = vunpack.c.h.b16 %v153
    %v688 = vunpack.c.l.b16 %v154
    %v689 = vunpack.c.h.b16 %v154
    %v690 = vunpack.c.l.b16 %v155
    %v691 = vunpack.c.h.b16 %v155
    %v692 = vunpack.c.l.b16 %v156
    %v693 = vunpack.c.h.b16 %v156
    %v694 = vunpack.c.l.b16 %v157
    %v695 = vunpack.c.h.b16 %v157
    %v696 = vunpack.c.l.b16 %v158
    %v697 = vunpack.c.h.b16 %v158
    %v698 = vunpack.c.l.b16 %v159
    %v699 = vunpack.c.h.b16 %v159
    %v700 = vunpack.c.l.b16 %v160
    %v701 = vunpack.c.h.b16 %v160
    %v702 = vunpack.c.l.b16 %v161
    %v703 = vunpack.c.h.b16 %v161
    %v704 = vunpack.c.l.b16 %v162
    %v705 = vunpack.c.h.b16 %v162
    %v706 = vunpack.c.l.b16 %v163
    %v707 = vunpack.c.h.b16 %v163
    %v708 = vunpack.c.l.b16 %v164
    %v709 = vunpack.c.h.b16 %v164
    %v710 = vunpack.c.l.b16 %v165
    %v711 = vunpack.c.h.b16 %v165
    %v712 = vunpack.c.l.b16 %v166
    %v713 = vunpack.c.h.b16 %v166
    %v714 = vunpack.c.l.b16 %v167
    %v715 = vunpack.c.h.b16 %v167
    %v716 = vunpack.c.l.b16 %v168
    %v717 = vunpack.c.h.b16 %v168
    %v718 = vunpack.c.l.b16 %v169
    %v719 = vunpack.c.h.b16 %v169
    %v720 = vunpack.c.l.b16 %v170
    %v721 = vunpack.c.h.b16 %v170
    %v722 = vunpack.c.l.b16 %v171
    %v723 = vunpack.c.h.b16 %v171
    %v724 = vunpack.c.l.b16 %v172
    %v725 = vunpack.c.h.b16 %v172
    %v726 = vunpack.c.l.b16 %v173
    %v727 = vunpack.c.h.b16 %v173
    %v728 = vunpack.c.l.b16 %v174
    %v729 = vunpack.c.h.b16 %v174
    %v730 = vunpack.c.l.b16 %v175
    %v731 = vunpack.c.h.b16 %v175
    %v732 = vunpack.c.l.b16 %v176
    %v733 = vunpack.c.h.b16 %v176
    %v734 = vunpack.c.l.b16 %v177
    %v735 = vunpack.c.h.b16 %v177
    %v736 = vunpack.c.l.b16 %v178
    %v737 = vunpack.c.h.b16 %v178
    %v738 = vunpack.c.l.b16 %v179
    %v739 = vunpack.c.h.b16 %v179
    %v740 = vunpack.c.l.b16 %v180
    %v741 = vunpack.c.h.b16 %v180
    %v742 = vunpack.c.l.b16 %v181
    %v743 = vunpack.c.h.b16 %v181
    %v744 = vunpack.c.l.b16 %v182
    %v745 = vunpack.c.h.b16 %v182
    %v746 = vunpack.c.l.b16 %v183
    %v747 = vunpack.c.h.b16 %v183
    %v748 = vunpack.c.l.b16 %v184
    %v749 = vunpack.c.h.b16 %v184
    %v750 = vunpack.c.l.b16 %v185
    %v751 = vunpack.c.h.b16 %v185
    %v752 = vunpack.c.l.b16 %v186
    %v753 = vunpack.c.h.b16 %v186
    %v754 = vunpack.c.l.b16 %v187
    %v755 = vunpack.c.h.b16 %v187
    %v756 = vunpack.c.l.b16 %v188
    %v757 = vunpack.c.h.b16 %v188
    %v758 = vunpack.c.l.b16 %v189
    %v759 = vunpack.c.h.b16 %v189
    %v760 = vunpack.c.l.b16 %v190
    %v761 = vunpack.c.h.b16 %v190
    %v762 = vunpack.c.l.b16 %v191
    %v763 = vunpack.c.h.b16 %v191
    %v764 = vunpack.c.l.b16 %v192
    %v765 = vunpack.c.h.b16 %v192
    %v766 = vunpack.c.l.b16 %v193
    %v767 = vunpack.c.h.b16 %v193
    %v768 = vunpack.c.l.b16 %v194
    %v769 = vunpack.c.h.b16 %v194
    %v770 = vunpack.c.l.b16 %v195
    %v771 = vunpack.c.h.b16 %v195
    %v772 = vunpack.c.l.b16 %v196
    %v773 = vunpack.c.h.b16 %v196
    %v774 = vunpack.c.l.b16 %v197
    %v775 = vunpack.c.h.b16 %v197
    %v776 = vunpack.c.l.b16 %v198
    %v777 = vunpack.c.h.b16 %v198
    %v778 = vunpack.c.l.b16 %v199
    %v779 = vunpack.c.h.b16 %v199
    %v780 = vunpack.c.l.b16 %v200
    %v781 = vunpack.c.h.b16 %v200
    %v782 = vunpack.c.l.b16 %v201
    %v783 = vunpack.c.h.b16 %v201
    %v784 = vunpack.c.l.b16 %v202
    %v785 = vunpack.c.h.b16 %v202
    %v786 = vunpack.c.l.b16 %v203
    %v787 = vunpack.c.h.b16 %v203
    %v788 = vunpack.c.l.b16 %v204
    %v789 = vunpack.c.h.b16 %v204
    %v790 = vunpack.c.l.b16 %v205
    %v791 = vunpack.c.h.b16 %v205
    %v792 = vunpack.c.l.b16 %v206
    %v793 = vunpack.c.h.b16 %v206
    %v794 = vunpack.c.l.b16 %v207
    %v795 = vunpack.c.h.b16 %v207
    %v796 = vunpack.c.l.b16 %v208
    %v797 = vunpack.c.h.b16 %v208
    %v798 = vunpack.c.l.b16 %v209
    %v799 = vunpack.c.h.b16 %v209
    %v800 = vunpack.c.l.b16 %v210
    %v801 = vunpack.c.h.b16 %v210
    %v802 = vunpack.c.l.b16 %v211
    %v803 = vunpack.c.h.b16 %v211
    %v804 = vunpack.c.l.b16 %v212
    %v805 = vunpack.c.h.b16 %v212
    %v806 = vunpack.c.l.b16 %v213
    %v807 = vunpack.c.h.b16 %v213
    %v808 = vunpack.c.l.b16 %v214
    %v809 = vunpack.c.h.b16 %v214
    %v810 = vunpack.c.l.b16 %v215
    %v811 = vunpack.c.h.b16 %v215
    %v812 = vunpack.c.l.b16 %v216
    %v813 = vunpack.c.h.b16 %v216
    %v814 = vunpack.c.l.b16 %v217
    %v815 = vunpack.c.h.b16 %v217
    %v816 = vunpack.c.l.b16 %v218
    %v817 = vunpack.c.h.b16 %v218
    %v818 = vunpack.c.l.b16 %v219
    %v819 = vunpack.c.h.b16 %v219
    %v820 = vunpack.c.l.b16 %v220
    %v821 = vunpack.c.h.b16 %v220
    %v822 = vunpack.c.l.b16 %v221
    %v823 = vunpack.c.h.b16 %v221
    %v824 = vunpack.c.l.b16 %v222
    %v825 = vunpack.c.h.b16 %v222
    %v826 = vunpack.c.l.b16 %v223
    %v827 = vunpack.c.h.b16 %v223
    %v828 = vunpack.c.l.b16 %v224
    %v829 = vunpack.c.h.b16 %v224
    %v830 = vunpack.c.l.b16 %v225
    %v831 = vunpack.c.h.b16 %v225
    %v832 = vunpack.c.l.b16 %v226
    %v833 = vunpack.c.h.b16 %v226
    %v834 = vunpack.c.l.b16 %v227
    %v835 = vunpack.c.h.b16 %v227
    %v836 = vunpack.c.l.b16 %v228
    %v837 = vunpack.c.h.b16 %v228
    %v838 = vunpack.c.l.b16 %v229
    %v839 = vunpack.c.h.b16 %v229
    %v840 = vunpack.c.l.b16 %v230
    %v841 = vunpack.c.h.b16 %v230
    %v842 = vunpack.c.l.b16 %v231
    %v843 = vunpack.c.h.b16 %v231
    %v844 = vunpack.c.l.b16 %v232
    %v845 = vunpack.c.h.b16 %v232
    %v846 = vunpack.c.l.b16 %v233
    %v847 = vunpack.c.h.b16 %v233
    %v848 = vunpack.c.l.b16 %v234
    %v849 = vunpack.c.h.b16 %v234
    %v850 = vunpack.c.l.b16 %v235
    %v851 = vunpack.c.h.b16 %v235
    %v852 = vunpack.c.l.b16 %v236
    %v853 = vunpack.c.h.b16 %v236
    %v854 = vunpack.c.l.b16 %v237
    %v855 = vunpack.c.h.b16 %v237
    %v856 = vunpack.c.l.b16 %v238
    %v857 = vunpack.c.h.b16 %v238
    %v858 = vunpack.c.l.b16 %v239
    %v859 = vunpack.c.h.b16 %v239
    %v860 = vunpack.c.l.b16 %v240
    %v861 = vunpack.c.h.b16 %v240
    %v862 = vunpack.c.l.b16 %v241
    %v863 = vunpack.c.h.b16 %v241
    %v864 = vunpack.c.l.b16 %v242
    %v865 = vunpack.c.h.b16 %v242
    %v866 = vunpack.c.l.b16 %v243
    %v867 = vunpack.c.h.b16 %v243
    %v868 = vunpack.c.l.b16 %v244
    %v869 = vunpack.c.h.b16 %v244
    %v870 = vunpack.c.l.b16 %v245
    %v871 = vunpack.c.h.b16 %v245
    %v872 = vunpack.c.l.b16 %v246
    %v873 = vunpack.c.h.b16 %v246
    %v874 = vunpack.c.l.b16 %v247
    %v875 = vunpack.c.h.b16 %v247
    %v876 = vunpack.c.l.b16 %v248
    %v877 = vunpack.c.h.b16 %v248
    %v878 = vunpack.c.l.b16 %v249
    %v879 = vunpack.c.h.b16 %v249
    %v880 = vunpack.c.l.b16 %v250
    %v881 = vunpack.c.h.b16 %v250
    %v882 = vunpack.c.l.b16 %v251
    %v883 = vunpack.c.h.b16 %v251
    %v884 = vunpack.c.l.b16 %v252
    %v885 = vunpack.c.h.b16 %v252
    %v886 = vunpack.c.l.b16 %v253
    %v887 = vunpack.c.h.b16 %v253
    %v888 = vunpack.c.l.b16 %v254
    %v889 = vunpack.c.h.b16 %v254
    %v890 = vunpack.c.l.b16 %v255
    %v891 = vunpack.c.h.b16 %v255
    %v892 = vunpack.c.l.b16 %v256
    %v893 = vunpack.c.h.b16 %v256
    %v894 = vunpack.c.l.b16 %v257
    %v895 = vunpack.c.h.b16 %v257
    %v896 = vunpack.c.l.b16 %v258
    %v897 = vunpack.c.h.b16 %v258
    %v898 = vunpack.c.l.b16 %v259
    %v899 = vunpack.c.h.b16 %v259
    %v900 = vunpack.c.l.b16 %v260
    %v901 = vunpack.c.h.b16 %v260
    %v902 = vunpack.c.l.b16 %v261
    %v903 = vunpack.c.h.b16 %v261
    %v904 = vunpack.c.l.b16 %v262
    %v905 = vunpack.c.h.b16 %v262
    %v906 = vunpack.c.l.b16 %v263
    %v907 = vunpack.c.h.b16 %v263
    %v908 = vunpack.c.l.b16 %v264
    %v909 = vunpack.c.h.b16 %v264
    %v910 = vpack.c.b16 %v522, %v518
    %v911 = vpack.c.b16 %v523, %v519
    %v912 = vpack.c.b16 %v524, %v520
    %v913 = vpack.c.b16 %v525, %v521
    %v914 = vpack.c.b16 %v530, %v526
    %v915 = vpack.c.b16 %v531, %v527
    %v916 = vpack.c.b16 %v532, %v528
    %v917 = vpack.c.b16 %v533, %v529
    %v918 = vpack.c.b16 %v538, %v534
    %v919 = vpack.c.b16 %v539, %v535
    %v920 = vpack.c.b16 %v540, %v536
    %v921 = vpack.c.b16 %v541, %v537
    %v922 = vpack.c.b16 %v546, %v542
    %v923 = vpack.c.b16 %v547, %v543
    %v924 = vpack.c.b16 %v548, %v544
    %v925 = vpack.c.b16 %v549, %v545
    %v926 = vpack.c.b16 %v554, %v550
    %v927 = vpack.c.b16 %v555, %v551
    %v928 = vpack.c.b16 %v556, %v552
    %v929 = vpack.c.b16 %v557, %v553
    %v930 = vpack.c.b16 %v562, %v558
    %v931 = vpack.c.b16 %v563, %v559
    %v932 = vpack.c.b16 %v564, %v560
    %v933 = vpack.c.b16 %v565, %v561
    %v934 = vpack.c.b16 %v570, %v566
    %v935 = vpack.c.b16 %v571, %v567
    %v936 = vpack.c.b16 %v572, %v568
    %v937 = vpack.c.b16 %v573, %v569
    %v938 = vpack.c.b16 %v578, %v574
    %v939 = vpack.c.b16 %v579, %v575
    %v940 = vpack.c.b16 %v580, %v576
    %v941 = vpack.c.b16 %v581, %v577
    %v942 = vpack.c.b16 %v586, %v582
    %v943 = vpack.c.b16 %v587, %v583
    %v944 = vpack.c.b16 %v588, %v584
    %v945 = vpack.c.b16 %v589, %v585
    %v946 = vpack.c.b16 %v594, %v590
    %v947 = vpack.c.b16 %v595, %v591
    %v948 = vpack.c.b16 %v596, %v592
    %v949 = vpack.c.b16 %v597, %v593
    %v950 = vpack.c.b16 %v602, %v598
    %v951 = vpack.c.b16 %v603, %v599
    %v952 = vpack.c.b16 %v604, %v600
    %v953 = vpack.c.b16 %v605, %v601
    %v954 = vpack.c.b16 %v610, %v606
    %v955 = vpack.c.b16 %v611, %v607
    %v956 = vpack.c.b16 %v612, %v608
    %v957 = vpack.c.b16 %v613, %v609
    %v958 = vpack.c.b16 %v618, %v614
    %v959 = vpack.c.b16 %v619, %v615
    %v960 = vpack.c.b16 %v620, %v616
    %v961 = vpack.c.b16 %v621, %v617
    %v962 = vpack.c.b16 %v626, %v622
    %v963 = vpack.c.b16 %v627, %v623
    %v964 = vpack.c.b16 %v628, %v624
    %v965 = vpack.c.b16 %v629, %v625
    %v966 = vpack.c.b16 %v634, %v630
    %v967 = vpack.c.b16 %v635, %v631
    %v968 = vpack.c.b16 %v636, %v632
    %v969 = vpack.c.b16 %v637, %v633
    %v970 = vpack.c.b16 %v642, %v638
    %v971 = vpack.c.b16 %v643, %v639
    %v972 = vpack.c.b16 %v644, %v640
    %v973 = vpack.c.b16 %v645, %v641
    %v974 = vpack.c.b16 %v650, %v646
    %v975 = vpack.c.b16 %v651, %v647
    %v976 = vpack.c.b16 %v652, %v648
    %v977 = vpack.c.b16 %v653, %v649
    %v978 = vpack.c.b16 %v658, %v654
    %v979 = vpack.c.b16 %v659, %v655
    %v980 = vpack.c.b16 %v660, %v656
    %v981 = vpack.c.b16 %v661, %v657
    %v982 = vpack.c.b16 %v666, %v662
    %v983 = vpack.c.b16 %v667, %v663
    %v984 = vpack.c.b16 %v668, %v664
    %v985 = vpack.c.b16 %v669, %v665
    %v986 = vpack.c.b16 %v674, %v670
    %v987 = vpack.c.b16 %v675, %v671
    %v988 = vpack.c.b16 %v676, %v672
    %v989 = vpack.c.b16 %v677, %v673
    %v990 = vpack.c.b16 %v682, %v678
    %v991 = vpack.c.b16 %v683, %v679
    %v992 = vpack.c.b16 %v684, %v680
    %v993 = vpack.c.b16 %v685, %v681
    %v994 = vpack.c.b16 %v690, %v686
    %v995 = vpack.c.b16 %v691, %v687
    %v996 = vpack.c.b16 %v692, %v688
    %v997 = vpack.c.b16 %v693, %v689
    %v998 = vpack.c.b16 %v698, %v694
    %v999 = vpack.c.b16 %v699, %v695
    %v1000 = vpack.c.b16 %v700, %v696
    %v1001 = vpack.c.b16 %v701, %v697
    %v1002 = vpack.c.b16 %v706, %v702
    %v1003 = vpack.c.b16 %v707, %v703
    %v1004 = vpack.c.b16 %v708, %v704
    %v1005 = vpack.c.b16 %v709, %v705
    %v1006 = vpack.c.b16 %v714, %v710
    %v1007 = vpack.c.b16 %v715, %v711
    %v1008 = vpack.c.b16 %v716, %v712
    %v1009 = vpack.c.b16 %v717, %v713
    %v1010 = vpack.c.b16 %v722, %v718
    %v1011 = vpack.c.b16 %v723, %v719
    %v1012 = vpack.c.b16 %v724, %v720
    %v1013 = vpack.c.b16 %v725, %v721
    %v1014 = vpack.c.b16 %v730, %v726
    %v1015 = vpack.c.b16 %v731, %v727
    %v1016 = vpack.c.b16 %v732, %v728
    %v1017 = vpack.c.b16 %v733, %v729
    %v1018 = vpack.c.b16 %v738, %v734
    %v1019 = vpack.c.b16 %v739, %v735
    %v1020 = vpack.c.b16 %v740, %v736
    %v1021 = vpack.c.b16 %v741, %v737
    %v1022 = vpack.c.b16 %v746, %v742
    %v1023 = vpack.c.b16 %v747, %v743
    %v1024 = vpack.c.b16 %v748, %v744
    %v1025 = vpack.c.b16 %v749, %v745
    %v1026 = vpack.c.b16 %v754, %v750
    %v1027 = vpack.c.b16 %v755, %v751
    %v1028 = vpack.c.b16 %v756, %v752
    %v1029 = vpack.c.b16 %v757, %v753
    %v1030 = vpack.c.b16 %v762, %v758
    %v1031 = vpack.c.b16 %v763, %v759
    %v1032 = vpack.c.b16 %v764, %v760
    %v1033 = vpack.c.b16 %v765, %v761
    %v1034 = vpack.c.b16 %v770, %v766
    %v1035 = vpack.c.b16 %v771, %v767
    %v1036 = vpack.c.b16 %v772, %v768
    %v1037 = vpack.c.b16 %v773, %v769
    %v1038 = vpack.c.b16 %v778, %v774
    %v1039 = vpack.c.b16 %v779, %v775
    %v1040 = vpack.c.b16 %v780, %v776
    %v1041 = vpack.c.b16 %v781, %v777
    %v1042 = vpack.c.b16 %v786, %v782
    %v1043 = vpack.c.b16 %v787, %v783
    %v1044 = vpack.c.b16 %v788, %v784
    %v1045 = vpack.c.b16 %v789, %v785
    %v1046 = vpack.c.b16 %v794, %v790
    %v1047 = vpack.c.b16 %v795, %v791
    %v1048 = vpack.c.b16 %v796, %v792
    %v1049 = vpack.c.b16 %v797, %v793
    %v1050 = vpack.c.b16 %v802, %v798
    %v1051 = vpack.c.b16 %v803, %v799
    %v1052 = vpack.c.b16 %v804, %v800
    %v1053 = vpack.c.b16 %v805, %v801
    %v1054 = vpack.c.b16 %v810, %v806
    %v1055 = vpack.c.b16 %v811, %v807
    %v1056 = vpack.c.b16 %v812, %v808
    %v1057 = vpack.c.b16 %v813, %v809
    %v1058 = vpack.c.b16 %v818, %v814
    %v1059 = vpack.c.b16 %v819, %v815
    %v1060 = vpack.c.b16 %v820, %v816
    %v1061 = vpack.c.b16 %v821, %v817
    %v1062 = vpack.c.b16 %v826, %v822
    %v1063 = vpack.c.b16 %v827, %v823
    %v1064 = vpack.c.b16 %v828, %v824
    %v1065 = vpack.c.b16 %v829, %v825
    %v1066 = vpack.c.b16 %v834, %v830
    %v1067 = vpack.c.b16 %v835, %v831
    %v1068 = vpack.c.b16 %v836, %v832
    %v1069 = vpack.c.b16 %v837, %v833
    %v1070 = vpack.c.b16 %v842, %v838
    %v1071 = vpack.c.b16 %v843, %v839
    %v1072 = vpack.c.b16 %v844, %v840
    %v1073 = vpack.c.b16 %v845, %v841
    %v1074 = vpack.c.b16 %v850, %v846
    %v1075 = vpack.c.b16 %v851, %v847
    %v1076 = vpack.c.b16 %v852, %v848
    %v1077 = vpack.c.b16 %v853, %v849
    %v1078 = vpack.c.b16 %v858, %v854
    %v1079 = vpack.c.b16 %v859, %v855
    %v1080 = vpack.c.b16 %v860, %v856
    %v1081 = vpack.c.b16 %v861, %v857
    %v1082 = vpack.c.b16 %v866, %v862
    %v1083 = vpack.c.b16 %v867, %v863
    %v1084 = vpack.c.b16 %v868, %v864
    %v1085 = vpack.c.b16 %v869, %v865
    %v1086 = vpack.c.b16 %v874, %v870
    %v1087 = vpack.c.b16 %v875, %v871
    %v1088 = vpack.c.b16 %v876, %v872
    %v1089 = vpack.c.b16 %v877, %v873
    %v1090 = vpack.c.b16 %v882, %v878
    %v1091 = vpack.c.b16 %v883, %v879
    %v1092 = vpack.c.b16 %v884, %v880
    %v1093 = vpack.c.b16 %v885, %v881
    %v1094 = vpack.c.b16 %v890, %v886
    %v1095 = vpack.c.b16 %v891, %v887
    %v1096 = vpack.c.b16 %v892, %v888
    %v1097 = vpack.c.b16 %v893, %v889
    %v1098 = vpack.c.b16 %v898, %v894
    %v1099 = vpack.c.b16 %v899, %v895
    %v1100 = vpack.c.b16 %v900, %v896
    %v1101 = vpack.c.b16 %v901, %v897
    %v1102 = vpack.c.b16 %v906, %v902
    %v1103 = vpack.c.b16 %v907, %v903
    %v1104 = vpack.c.b16 %v908, %v904
    %v1105 = vpack.c.b16 %v909, %v905
    %vm1302 = vcmask 130048
    %v1304 = vsel %vm1302, %v315, 0
    %1306 = vmatprep.subr.bf16.mxu0 %v911
    %1307 = vmatpush1.bf16.msra.mxu0 %v910
    %1308 = vmatprep.subr.bf16.mxu0 %v915
    %1309 = vmatpush1.bf16.msra.mxu0 %v914
    %1310 = vmatprep.subr.bf16.mxu0 %v919
    %1311 = vmatpush1.bf16.msra.mxu0 %v918
    %1312 = vmatprep.subr.bf16.mxu0 %v923
    %1313 = vmatpush1.bf16.msra.mxu0 %v922
    %1314 = vmatprep.subr.bf16.mxu0 %v927
    %1315 = vmatpush1.bf16.msra.mxu0 %v926
    %1316 = vmatprep.subr.bf16.mxu0 %v931
    %1317 = vmatpush1.bf16.msra.mxu0 %v930
    %1318 = vmatprep.subr.bf16.mxu0 %v935
    %1319 = vmatpush1.bf16.msra.mxu0 %v934
    %1320 = vmatprep.subr.bf16.mxu0 %v939
    %1321 = vmatpush1.bf16.msra.mxu0 %v938
    %1322 = vmatprep.subr.bf16.mxu0 %v943
    %1323 = vmatpush1.bf16.msra.mxu0 %v942
    %1324 = vmatprep.subr.bf16.mxu0 %v947
    %1325 = vmatpush1.bf16.msra.mxu0 %v946
    %1326 = vmatprep.subr.bf16.mxu0 %v951
    %1327 = vmatpush1.bf16.msra.mxu0 %v950
    %1328 = vmatprep.subr.bf16.mxu0 %v955
    %1329 = vmatpush1.bf16.msra.mxu0 %v954
    %1330 = vmatprep.subr.bf16.mxu0 %v959
    %1331 = vmatpush1.bf16.msra.mxu0 %v958
    %1332 = vmatprep.subr.bf16.mxu0 %v963
    %1333 = vmatpush1.bf16.msra.mxu0 %v962
    %1334 = vmatprep.subr.bf16.mxu0 %v967
    %1335 = vmatpush1.bf16.msra.mxu0 %v966
    %1336 = vmatprep.subr.bf16.mxu0 %v971
    %1337 = vmatpush1.bf16.msra.mxu0 %v970
    %1338 = vmatprep.mubr.bf16.mxu0 %v310
    %1339 = vmatmul.mubr.bf16.gmra.mrb[0].mxu0 %v309
    %v1340 = vpop.f32.mrb[0].mxu0
    %v1341 = vadd.f32 %v270, %v1340
    %v1342 = vpop.f32.mrb[0].mxu0
    %v1343 = vadd.f32 %v274, %v1342
    %v1344 = vpop.f32.mrb[0].mxu0
    %v1345 = vadd.f32 %v270, %v1344
    %v1346 = vpop.f32.mrb[0].mxu0
    %v1347 = vadd.f32 %v274, %v1346
    %1348 = vdwg.mxu0
    %1349 = vmatprep.subr.bf16.mxu0 %v975
    %1350 = vmatpush1.bf16.msra.mxu0 %v974
    %1351 = vmatprep.subr.bf16.mxu0 %v979
    %1352 = vmatpush1.bf16.msra.mxu0 %v978
    %1353 = vmatprep.subr.bf16.mxu0 %v983
    %1354 = vmatpush1.bf16.msra.mxu0 %v982
    %1355 = vmatprep.subr.bf16.mxu0 %v987
    %1356 = vmatpush1.bf16.msra.mxu0 %v986
    %1357 = vmatprep.subr.bf16.mxu0 %v991
    %1358 = vmatpush1.bf16.msra.mxu0 %v990
    %1359 = vmatprep.subr.bf16.mxu0 %v995
    %1360 = vmatpush1.bf16.msra.mxu0 %v994
    %1361 = vmatprep.subr.bf16.mxu0 %v999
    %1362 = vmatpush1.bf16.msra.mxu0 %v998
    %1363 = vmatprep.subr.bf16.mxu0 %v1003
    %1364 = vmatpush1.bf16.msra.mxu0 %v1002
    %1365 = vmatprep.subr.bf16.mxu0 %v1007
    %1366 = vmatpush1.bf16.msra.mxu0 %v1006
    %1367 = vmatprep.subr.bf16.mxu0 %v1011
    %1368 = vmatpush1.bf16.msra.mxu0 %v1010
    %1369 = vmatprep.subr.bf16.mxu0 %v1015
    %1370 = vmatpush1.bf16.msra.mxu0 %v1014
    %1371 = vmatprep.subr.bf16.mxu0 %v1019
    %1372 = vmatpush1.bf16.msra.mxu0 %v1018
    %1373 = vmatprep.subr.bf16.mxu0 %v1023
    %1374 = vmatpush1.bf16.msra.mxu0 %v1022
    %1375 = vmatprep.subr.bf16.mxu0 %v1027
    %1376 = vmatpush1.bf16.msra.mxu0 %v1026
    %1377 = vmatprep.subr.bf16.mxu0 %v1031
    %1378 = vmatpush1.bf16.msra.mxu0 %v1030
    %1379 = vmatprep.subr.bf16.mxu0 %v1035
    %1380 = vmatpush1.bf16.msra.mxu0 %v1034
    %1381 = vmatprep.mubr.bf16.mxu0 %v312
    %1382 = vmatmul.mubr.bf16.gmra.mrb[0].mxu0 %v311
    %v1383 = vpop.f32.mrb[0].mxu0
    %v1384 = vadd.f32 %v1341, %v1383
    %v1385 = vpop.f32.mrb[0].mxu0
    %v1386 = vadd.f32 %v1343, %v1385
    %v1387 = vpop.f32.mrb[0].mxu0
    %v1388 = vadd.f32 %v1345, %v1387
    %v1389 = vpop.f32.mrb[0].mxu0
    %v1390 = vadd.f32 %v1347, %v1389
    %1391 = vdwg.mxu0
    %1392 = vmatprep.subr.bf16.mxu0 %v1039
    %1393 = vmatpush1.bf16.msra.mxu0 %v1038
    %1394 = vmatprep.subr.bf16.mxu0 %v1043
    %1395 = vmatpush1.bf16.msra.mxu0 %v1042
    %1396 = vmatprep.subr.bf16.mxu0 %v1047
    %1397 = vmatpush1.bf16.msra.mxu0 %v1046
    %1398 = vmatprep.subr.bf16.mxu0 %v1051
    %1399 = vmatpush1.bf16.msra.mxu0 %v1050
    %1400 = vmatprep.subr.bf16.mxu0 %v1055
    %1401 = vmatpush1.bf16.msra.mxu0 %v1054
    %1402 = vmatprep.subr.bf16.mxu0 %v1059
    %1403 = vmatpush1.bf16.msra.mxu0 %v1058
    %1404 = vmatprep.subr.bf16.mxu0 %v1063
    %1405 = vmatpush1.bf16.msra.mxu0 %v1062
    %1406 = vmatprep.subr.bf16.mxu0 %v1067
    %1407 = vmatpush1.bf16.msra.mxu0 %v1066
    %1408 = vmatprep.subr.bf16.mxu0 %v1071
    %1409 = vmatpush1.bf16.msra.mxu0 %v1070
    %1410 = vmatprep.subr.bf16.mxu0 %v1075
    %1411 = vmatpush1.bf16.msra.mxu0 %v1074
    %1412 = vmatprep.subr.bf16.mxu0 %v1079
    %1413 = vmatpush1.bf16.msra.mxu0 %v1078
    %1414 = vmatprep.subr.bf16.mxu0 %v1083
    %1415 = vmatpush1.bf16.msra.mxu0 %v1082
    %1416 = vmatprep.subr.bf16.mxu0 %v1087
    %1417 = vmatpush1.bf16.msra.mxu0 %v1086
    %1418 = vmatprep.subr.bf16.mxu0 %v1091
    %1419 = vmatpush1.bf16.msra.mxu0 %v1090
    %1420 = vmatprep.subr.bf16.mxu0 %v1095
    %1421 = vmatpush1.bf16.msra.mxu0 %v1094
    %1422 = vmatprep.subr.bf16.mxu0 %v1099
    %1423 = vmatpush1.bf16.msra.mxu0 %v1098
    %1424 = vmatprep.mubr.bf16.mxu0 %v314
    %1425 = vmatmul.mubr.bf16.gmra.mrb[0].mxu0 %v313
    %v1426 = vpop.f32.mrb[0].mxu0
    %v1427 = vadd.f32 %v1384, %v1426
    %v1428 = vpop.f32.mrb[0].mxu0
    %v1429 = vadd.f32 %v1386, %v1428
    %v1430 = vpop.f32.mrb[0].mxu0
    %v1431 = vadd.f32 %v1388, %v1430
    %v1432 = vpop.f32.mrb[0].mxu0
    %v1433 = vadd.f32 %v1390, %v1432
    %1434 = vdwg.mxu0
    %1435 = vmatprep.subr.bf16.mxu0 %v1103
    %1436 = vmatpush1.bf16.msra.mxu0 %v1102
    %1437 = vmatprep.subr.bf16.mxu0 0
    %1438 = vmatpush1.bf16.msra.mxu0 0
    %1439 = vmatprep.subr.bf16.mxu0 0
    %1440 = vmatpush1.bf16.msra.mxu0 0
    %1441 = vmatprep.subr.bf16.mxu0 0
    %1442 = vmatpush1.bf16.msra.mxu0 0
    %1443 = vmatprep.subr.bf16.mxu0 0
    %1444 = vmatpush1.bf16.msra.mxu0 0
    %1445 = vmatprep.subr.bf16.mxu0 0
    %1446 = vmatpush1.bf16.msra.mxu0 0
    %1447 = vmatprep.subr.bf16.mxu0 0
    %1448 = vmatpush1.bf16.msra.mxu0 0
    %1449 = vmatprep.subr.bf16.mxu0 0
    %1450 = vmatpush1.bf16.msra.mxu0 0
    %1451 = vmatprep.subr.bf16.mxu0 0
    %1452 = vmatpush1.bf16.msra.mxu0 0
    %1453 = vmatprep.subr.bf16.mxu0 0
    %1454 = vmatpush1.bf16.msra.mxu0 0
    %1455 = vmatprep.subr.bf16.mxu0 0
    %1456 = vmatpush1.bf16.msra.mxu0 0
    %1457 = vmatprep.subr.bf16.mxu0 0
    %1458 = vmatpush1.bf16.msra.mxu0 0
    %1459 = vmatprep.subr.bf16.mxu0 0
    %1460 = vmatpush1.bf16.msra.mxu0 0
    %1461 = vmatprep.subr.bf16.mxu0 0
    %1462 = vmatpush1.bf16.msra.mxu0 0
    %1463 = vmatprep.subr.bf16.mxu0 0
    %1464 = vmatpush1.bf16.msra.mxu0 0
    %1465 = vmatprep.subr.bf16.mxu0 0
    %1466 = vmatpush1.bf16.msra.mxu0 0
    %1467 = vmatprep.mubr.bf16.mxu0 0
    %1468 = vmatmul.mubr.bf16.gmra.mrb[0].mxu0 %v1304
    %v1469 = vpop.f32.mrb[0].mxu0
    %v1470 = vadd.f32 %v1427, %v1469
    %v1471 = vpop.f32.mrb[0].mxu0
    %v1472 = vadd.f32 %v1429, %v1471
    %v1473 = vpop.f32.mrb[0].mxu0
    %v1474 = vadd.f32 %v1431, %v1473
    %v1475 = vpop.f32.mrb[0].mxu0
    %v1476 = vadd.f32 %v1433, %v1475
    %1477 = vdwg.mxu0
    %1478 = vmatprep.subr.bf16.mxu0 %v913
    %1479 = vmatpush1.bf16.msra.mxu0 %v912
    %1480 = vmatprep.subr.bf16.mxu0 %v917
    %1481 = vmatpush1.bf16.msra.mxu0 %v916
    %1482 = vmatprep.subr.bf16.mxu0 %v921
    %1483 = vmatpush1.bf16.msra.mxu0 %v920
    %1484 = vmatprep.subr.bf16.mxu0 %v925
    %1485 = vmatpush1.bf16.msra.mxu0 %v924
    %1486 = vmatprep.subr.bf16.mxu0 %v929
    %1487 = vmatpush1.bf16.msra.mxu0 %v928
    %1488 = vmatprep.subr.bf16.mxu0 %v933
    %1489 = vmatpush1.bf16.msra.mxu0 %v932
    %1490 = vmatprep.subr.bf16.mxu0 %v937
    %1491 = vmatpush1.bf16.msra.mxu0 %v936
    %1492 = vmatprep.subr.bf16.mxu0 %v941
    %1493 = vmatpush1.bf16.msra.mxu0 %v940
    %1494 = vmatprep.subr.bf16.mxu0 %v945
    %1495 = vmatpush1.bf16.msra.mxu0 %v944
    %1496 = vmatprep.subr.bf16.mxu0 %v949
    %1497 = vmatpush1.bf16.msra.mxu0 %v948
    %1498 = vmatprep.subr.bf16.mxu0 %v953
    %1499 = vmatpush1.bf16.msra.mxu0 %v952
    %1500 = vmatprep.subr.bf16.mxu0 %v957
    %1501 = vmatpush1.bf16.msra.mxu0 %v956
    %1502 = vmatprep.subr.bf16.mxu0 %v961
    %1503 = vmatpush1.bf16.msra.mxu0 %v960
    %1504 = vmatprep.subr.bf16.mxu0 %v965
    %1505 = vmatpush1.bf16.msra.mxu0 %v964
    %1506 = vmatprep.subr.bf16.mxu0 %v969
    %1507 = vmatpush1.bf16.msra.mxu0 %v968
    %1508 = vmatprep.subr.bf16.mxu0 %v973
    %1509 = vmatpush1.bf16.msra.mxu0 %v972
    %1510 = vmatprep.mubr.bf16.mxu0 %v310
    %1511 = vmatmul.mubr.bf16.gmra.mrb[0].mxu0 %v309
    %v1512 = vpop.f32.mrb[0].mxu0
    %v1513 = vadd.f32 %v278, %v1512
    %v1514 = vpop.f32.mrb[0].mxu0
    %v1515 = vadd.f32 %v282, %v1514
    %v1516 = vpop.f32.mrb[0].mxu0
    %v1517 = vadd.f32 %v278, %v1516
    %v1518 = vpop.f32.mrb[0].mxu0
    %v1519 = vadd.f32 %v282, %v1518
    %1520 = vdwg.mxu0
    %1521 = vmatprep.subr.bf16.mxu0 %v977
    %1522 = vmatpush1.bf16.msra.mxu0 %v976
    %1523 = vmatprep.subr.bf16.mxu0 %v981
    %1524 = vmatpush1.bf16.msra.mxu0 %v980
    %1525 = vmatprep.subr.bf16.mxu0 %v985
    %1526 = vmatpush1.bf16.msra.mxu0 %v984
    %1527 = vmatprep.subr.bf16.mxu0 %v989
    %1528 = vmatpush1.bf16.msra.mxu0 %v988
    %1529 = vmatprep.subr.bf16.mxu0 %v993
    %1530 = vmatpush1.bf16.msra.mxu0 %v992
    %1531 = vmatprep.subr.bf16.mxu0 %v997
    %1532 = vmatpush1.bf16.msra.mxu0 %v996
    %1533 = vmatprep.subr.bf16.mxu0 %v1001
    %1534 = vmatpush1.bf16.msra.mxu0 %v1000
    %1535 = vmatprep.subr.bf16.mxu0 %v1005
    %1536 = vmatpush1.bf16.msra.mxu0 %v1004
    %1537 = vmatprep.subr.bf16.mxu0 %v1009
    %1538 = vmatpush1.bf16.msra.mxu0 %v1008
    %1539 = vmatprep.subr.bf16.mxu0 %v1013
    %1540 = vmatpush1.bf16.msra.mxu0 %v1012
    %1541 = vmatprep.subr.bf16.mxu0 %v1017
    %1542 = vmatpush1.bf16.msra.mxu0 %v1016
    %1543 = vmatprep.subr.bf16.mxu0 %v1021
    %1544 = vmatpush1.bf16.msra.mxu0 %v1020
    %1545 = vmatprep.subr.bf16.mxu0 %v1025
    %1546 = vmatpush1.bf16.msra.mxu0 %v1024
    %1547 = vmatprep.subr.bf16.mxu0 %v1029
    %1548 = vmatpush1.bf16.msra.mxu0 %v1028
    %1549 = vmatprep.subr.bf16.mxu0 %v1033
    %1550 = vmatpush1.bf16.msra.mxu0 %v1032
    %1551 = vmatprep.subr.bf16.mxu0 %v1037
    %1552 = vmatpush1.bf16.msra.mxu0 %v1036
    %1553 = vmatprep.mubr.bf16.mxu0 %v312
    %1554 = vmatmul.mubr.bf16.gmra.mrb[0].mxu0 %v311
    %v1555 = vpop.f32.mrb[0].mxu0
    %v1556 = vadd.f32 %v1513, %v1555
    %v1557 = vpop.f32.mrb[0].mxu0
    %v1558 = vadd.f32 %v1515, %v1557
    %v1559 = vpop.f32.mrb[0].mxu0
    %v1560 = vadd.f32 %v1517, %v1559
    %v1561 = vpop.f32.mrb[0].mxu0
    %v1562 = vadd.f32 %v1519, %v1561
    %1563 = vdwg.mxu0
    %1564 = vmatprep.subr.bf16.mxu0 %v1041
    %1565 = vmatpush1.bf16.msra.mxu0 %v1040
    %1566 = vmatprep.subr.bf16.mxu0 %v1045
    %1567 = vmatpush1.bf16.msra.mxu0 %v1044
    %1568 = vmatprep.subr.bf16.mxu0 %v1049
    %1569 = vmatpush1.bf16.msra.mxu0 %v1048
    %1570 = vmatprep.subr.bf16.mxu0 %v1053
    %1571 = vmatpush1.bf16.msra.mxu0 %v1052
    %1572 = vmatprep.subr.bf16.mxu0 %v1057
    %1573 = vmatpush1.bf16.msra.mxu0 %v1056
    %1574 = vmatprep.subr.bf16.mxu0 %v1061
    %1575 = vmatpush1.bf16.msra.mxu0 %v1060
    %1576 = vmatprep.subr.bf16.mxu0 %v1065
    %1577 = vmatpush1.bf16.msra.mxu0 %v1064
    %1578 = vmatprep.subr.bf16.mxu0 %v1069
    %1579 = vmatpush1.bf16.msra.mxu0 %v1068
    %1580 = vmatprep.subr.bf16.mxu0 %v1073
    %1581 = vmatpush1.bf16.msra.mxu0 %v1072
    %1582 = vmatprep.subr.bf16.mxu0 %v1077
    %1583 = vmatpush1.bf16.msra.mxu0 %v1076
    %1584 = vmatprep.subr.bf16.mxu0 %v1081
    %1585 = vmatpush1.bf16.msra.mxu0 %v1080
    %1586 = vmatprep.subr.bf16.mxu0 %v1085
    %1587 = vmatpush1.bf16.msra.mxu0 %v1084
    %1588 = vmatprep.subr.bf16.mxu0 %v1089
    %1589 = vmatpush1.bf16.msra.mxu0 %v1088
    %1590 = vmatprep.subr.bf16.mxu0 %v1093
    %1591 = vmatpush1.bf16.msra.mxu0 %v1092
    %1592 = vmatprep.subr.bf16.mxu0 %v1097
    %1593 = vmatpush1.bf16.msra.mxu0 %v1096
    %1594 = vmatprep.subr.bf16.mxu0 %v1101
    %1595 = vmatpush1.bf16.msra.mxu0 %v1100
    %1596 = vmatprep.mubr.bf16.mxu0 %v314
    %1597 = vmatmul.mubr.bf16.gmra.mrb[0].mxu0 %v313
    %v1598 = vpop.f32.mrb[0].mxu0
    %v1599 = vadd.f32 %v1556, %v1598
    %v1600 = vpop.f32.mrb[0].mxu0
    %v1601 = vadd.f32 %v1558, %v1600
    %v1602 = vpop.f32.mrb[0].mxu0
    %v1603 = vadd.f32 %v1560, %v1602
    %v1604 = vpop.f32.mrb[0].mxu0
    %v1605 = vadd.f32 %v1562, %v1604
    %1606 = vdwg.mxu0
    %1607 = vmatprep.subr.bf16.mxu0 %v1105
    %1608 = vmatpush1.bf16.msra.mxu0 %v1104
    %1609 = vmatprep.subr.bf16.mxu0 0
    %1610 = vmatpush1.bf16.msra.mxu0 0
    %1611 = vmatprep.subr.bf16.mxu0 0
    %1612 = vmatpush1.bf16.msra.mxu0 0
    %1613 = vmatprep.subr.bf16.mxu0 0
    %1614 = vmatpush1.bf16.msra.mxu0 0
    %1615 = vmatprep.subr.bf16.mxu0 0
    %1616 = vmatpush1.bf16.msra.mxu0 0
    %1617 = vmatprep.subr.bf16.mxu0 0
    %1618 = vmatpush1.bf16.msra.mxu0 0
    %1619 = vmatprep.subr.bf16.mxu0 0
    %1620 = vmatpush1.bf16.msra.mxu0 0
    %1621 = vmatprep.subr.bf16.mxu0 0
    %1622 = vmatpush1.bf16.msra.mxu0 0
    %1623 = vmatprep.subr.bf16.mxu0 0
    %1624 = vmatpush1.bf16.msra.mxu0 0
    %1625 = vmatprep.subr.bf16.mxu0 0
    %1626 = vmatpush1.bf16.msra.mxu0 0
    %1627 = vmatprep.subr.bf16.mxu0 0
    %1628 = vmatpush1.bf16.msra.mxu0 0
    %1629 = vmatprep.subr.bf16.mxu0 0
    %1630 = vmatpush1.bf16.msra.mxu0 0
    %1631 = vmatprep.subr.bf16.mxu0 0
    %1632 = vmatpush1.bf16.msra.mxu0 0
    %1633 = vmatprep.subr.bf16.mxu0 0
    %1634 = vmatpush1.bf16.msra.mxu0 0
    %1635 = vmatprep.subr.bf16.mxu0 0
    %1636 = vmatpush1.bf16.msra.mxu0 0
    %1637 = vmatprep.subr.bf16.mxu0 0
    %1638 = vmatpush1.bf16.msra.mxu0 0
    %1639 = vmatprep.mubr.bf16.mxu0 0
    %1640 = vmatmul.mubr.bf16.gmra.mrb[0].mxu0 %v1304
    %v1641 = vpop.f32.mrb[0].mxu0
    %v1642 = vadd.f32 %v1599, %v1641
    %v1643 = vpop.f32.mrb[0].mxu0
    %v1644 = vadd.f32 %v1601, %v1643
    %v1645 = vpop.f32.mrb[0].mxu0
    %v1646 = vadd.f32 %v1603, %v1645
    %v1647 = vpop.f32.mrb[0].mxu0
    %v1648 = vadd.f32 %v1605, %v1647
    %1649 = vdwg.mxu0
    %v1650 = vmax.f32 %v1470, 0.0
    %v1651 = vmax.f32 %v1472, 0.0
    %v1652 = vmax.f32 %v1642, 0.0
    %v1653 = vmax.f32 %v1644, 0.0
    %v1654 = vmax.f32 %v1474, 0.0
    %v1655 = vmax.f32 %v1476, 0.0
    %v1656 = vmax.f32 %v1646, 0.0
    %v1657 = vmax.f32 %v1648, 0.0
    %v1658 = vpack.c.bf16 %v1654, %v1650
    %v1659 = vpack.c.bf16 %v1655, %v1651
    %v1660 = vpack.c.bf16 %v1656, %v1652
    %v1661 = vpack.c.bf16 %v1657, %v1653
    %v1662 = vld [vmem:[%s3] sm:$0xff]
    %v1663 = vld [vmem:[%s3 + $0x8] sm:$0xff]
    %v1664 = vld [vmem:[%s3 + $0x10] sm:$0xff]
    %v1665 = vld [vmem:[%s3 + $0x18] sm:$0xff]
    %v1666 = vld [vmem:[%s3 + $0x20] sm:$0xff]
    %v1667 = vld [vmem:[%s3 + $0x28] sm:$0xff]
    %v1668 = vld [vmem:[%s3 + $0x30] sm:$0xff]
    %v1669 = vld [vmem:[%s3 + $0x38] sm:$0xff]
    %v1670 = vld [vmem:[%s3 + $0x40] sm:$0xff]
    %v1671 = vld [vmem:[%s3 + $0x48] sm:$0xff]
    %v1672 = vld [vmem:[%s3 + $0x50] sm:$0xff]
    %v1673 = vld [vmem:[%s3 + $0x58] sm:$0xff]
    %v1674 = vld [vmem:[%s3 + $0x60] sm:$0xff]
    %v1675 = vld [vmem:[%s3 + $0x68] sm:$0xff]
    %v1676 = vld [vmem:[%s3 + $0x70] sm:$0xff]
    %v1677 = vld [vmem:[%s3 + $0x78] sm:$0xff]
    %v1678 = vld [vmem:[%s3 + $0x80] sm:$0xff]
    %v1679 = vld [vmem:[%s3 + $0x88] sm:$0xff]
    %v1680 = vld [vmem:[%s3 + $0x90] sm:$0xff]
    %v1681 = vld [vmem:[%s3 + $0x98] sm:$0xff]
    %v1682 = vld [vmem:[%s3 + $0xa0] sm:$0xff]
    %v1683 = vld [vmem:[%s3 + $0xa8] sm:$0xff]
    %v1684 = vld [vmem:[%s3 + $0xb0] sm:$0xff]
    %v1685 = vld [vmem:[%s3 + $0xb8] sm:$0xff]
    %v1686 = vld [vmem:[%s3 + $0xc0] sm:$0xff]
    %v1687 = vld [vmem:[%s3 + $0xc8] sm:$0xff]
    %v1688 = vld [vmem:[%s3 + $0xd0] sm:$0xff]
    %v1689 = vld [vmem:[%s3 + $0xd8] sm:$0xff]
    %v1690 = vld [vmem:[%s3 + $0xe0] sm:$0xff]
    %v1691 = vld [vmem:[%s3 + $0xe8] sm:$0xff]
    %v1692 = vld [vmem:[%s3 + $0xf0] sm:$0xff]
    %v1693 = vld [vmem:[%s3 + $0xf8] sm:$0xff]
    %v1694 = vld [vmem:[%s3 + $0x100] sm:$0xff]
    %v1695 = vld [vmem:[%s3 + $0x108] sm:$0xff]
    %v1696 = vld [vmem:[%s3 + $0x110] sm:$0xff]
    %v1697 = vld [vmem:[%s3 + $0x118] sm:$0xff]
    %v1698 = vld [vmem:[%s3 + $0x120] sm:$0xff]
    %v1699 = vld [vmem:[%s3 + $0x128] sm:$0xff]
    %v1700 = vld [vmem:[%s3 + $0x130] sm:$0xff]
    %v1701 = vld [vmem:[%s3 + $0x138] sm:$0xff]
    %v1702 = vld [vmem:[%s3 + $0x140] sm:$0xff]
    %v1703 = vld [vmem:[%s3 + $0x148] sm:$0xff]
    %v1704 = vld [vmem:[%s3 + $0x150] sm:$0xff]
    %v1705 = vld [vmem:[%s3 + $0x158] sm:$0xff]
    %v1706 = vld [vmem:[%s3 + $0x160] sm:$0xff]
    %v1707 = vld [vmem:[%s3 + $0x168] sm:$0xff]
    %v1708 = vld [vmem:[%s3 + $0x170] sm:$0xff]
    %v1709 = vld [vmem:[%s3 + $0x178] sm:$0xff]
    %v1710 = vld [vmem:[%s3 + $0x180] sm:$0xff]
    %v1711 = vld [vmem:[%s3 + $0x188] sm:$0xff]
    %v1712 = vld [vmem:[%s3 + $0x190] sm:$0xff]
    %v1713 = vld [vmem:[%s3 + $0x198] sm:$0xff]
    %v1714 = vld [vmem:[%s3 + $0x1a0] sm:$0xff]
    %v1715 = vld [vmem:[%s3 + $0x1a8] sm:$0xff]
    %v1716 = vld [vmem:[%s3 + $0x1b0] sm:$0xff]
    %v1717 = vld [vmem:[%s3 + $0x1b8] sm:$0xff]
    %v1718 = vld [vmem:[%s3 + $0x1c0] sm:$0xff]
    %v1719 = vld [vmem:[%s3 + $0x1c8] sm:$0xff]
    %v1720 = vld [vmem:[%s3 + $0x1d0] sm:$0xff]
    %v1721 = vld [vmem:[%s3 + $0x1d8] sm:$0xff]
    %v1722 = vld [vmem:[%s3 + $0x1e0] sm:$0xff]
    %v1723 = vld [vmem:[%s3 + $0x1e8] sm:$0xff]
    %v1724 = vld [vmem:[%s3 + $0x1f0] sm:$0xff]
    %v1725 = vld [vmem:[%s3 + $0x1f8] sm:$0xff]
    %v1726 = vld [vmem:[%s4] sm:$0x3]
    %v1728 = vlaneseq
    %v1729 = vshrl.u32 %v1728, 7
    %v1730 = vsub.s32 0, %v1729
    %v1731 = vrot.slane %v1726, %v1730
    %v1732 = vlaneseq
    %v1733 = vshrl.u32 %v1732, 7
    %v1734 = vsub.s32 1, %v1733
    %v1735 = vrot.slane %v1726, %v1734
    %v1802 = vunpack.c.l.b16 %v1662
    %v1803 = vunpack.c.h.b16 %v1662
    %v1804 = vunpack.c.l.b16 %v1663
    %v1805 = vunpack.c.h.b16 %v1663
    %v1806 = vunpack.c.l.b16 %v1664
    %v1807 = vunpack.c.h.b16 %v1664
    %v1808 = vunpack.c.l.b16 %v1665
    %v1809 = vunpack.c.h.b16 %v1665
    %v1810 = vunpack.c.l.b16 %v1666
    %v1811 = vunpack.c.h.b16 %v1666
    %v1812 = vunpack.c.l.b16 %v1667
    %v1813 = vunpack.c.h.b16 %v1667
    %v1814 = vunpack.c.l.b16 %v1668
    %v1815 = vunpack.c.h.b16 %v1668
    %v1816 = vunpack.c.l.b16 %v1669
    %v1817 = vunpack.c.h.b16 %v1669
    %v1818 = vunpack.c.l.b16 %v1670
    %v1819 = vunpack.c.h.b16 %v1670
    %v1820 = vunpack.c.l.b16 %v1671
    %v1821 = vunpack.c.h.b16 %v1671
    %v1822 = vunpack.c.l.b16 %v1672
    %v1823 = vunpack.c.h.b16 %v1672
    %v1824 = vunpack.c.l.b16 %v1673
    %v1825 = vunpack.c.h.b16 %v1673
    %v1826 = vunpack.c.l.b16 %v1674
    %v1827 = vunpack.c.h.b16 %v1674
    %v1828 = vunpack.c.l.b16 %v1675
    %v1829 = vunpack.c.h.b16 %v1675
    %v1830 = vunpack.c.l.b16 %v1676
    %v1831 = vunpack.c.h.b16 %v1676
    %v1832 = vunpack.c.l.b16 %v1677
    %v1833 = vunpack.c.h.b16 %v1677
    %v1834 = vunpack.c.l.b16 %v1678
    %v1835 = vunpack.c.h.b16 %v1678
    %v1836 = vunpack.c.l.b16 %v1679
    %v1837 = vunpack.c.h.b16 %v1679
    %v1838 = vunpack.c.l.b16 %v1680
    %v1839 = vunpack.c.h.b16 %v1680
    %v1840 = vunpack.c.l.b16 %v1681
    %v1841 = vunpack.c.h.b16 %v1681
    %v1842 = vunpack.c.l.b16 %v1682
    %v1843 = vunpack.c.h.b16 %v1682
    %v1844 = vunpack.c.l.b16 %v1683
    %v1845 = vunpack.c.h.b16 %v1683
    %v1846 = vunpack.c.l.b16 %v1684
    %v1847 = vunpack.c.h.b16 %v1684
    %v1848 = vunpack.c.l.b16 %v1685
    %v1849 = vunpack.c.h.b16 %v1685
    %v1850 = vunpack.c.l.b16 %v1686
    %v1851 = vunpack.c.h.b16 %v1686
    %v1852 = vunpack.c.l.b16 %v1687
    %v1853 = vunpack.c.h.b16 %v1687
    %v1854 = vunpack.c.l.b16 %v1688
    %v1855 = vunpack.c.h.b16 %v1688
    %v1856 = vunpack.c.l.b16 %v1689
    %v1857 = vunpack.c.h.b16 %v1689
    %v1858 = vunpack.c.l.b16 %v1690
    %v1859 = vunpack.c.h.b16 %v1690
    %v1860 = vunpack.c.l.b16 %v1691
    %v1861 = vunpack.c.h.b16 %v1691
    %v1862 = vunpack.c.l.b16 %v1692
    %v1863 = vunpack.c.h.b16 %v1692
    %v1864 = vunpack.c.l.b16 %v1693
    %v1865 = vunpack.c.h.b16 %v1693
    %v1866 = vunpack.c.l.b16 %v1694
    %v1867 = vunpack.c.h.b16 %v1694
    %v1868 = vunpack.c.l.b16 %v1695
    %v1869 = vunpack.c.h.b16 %v1695
    %v1870 = vunpack.c.l.b16 %v1696
    %v1871 = vunpack.c.h.b16 %v1696
    %v1872 = vunpack.c.l.b16 %v1697
    %v1873 = vunpack.c.h.b16 %v1697
    %v1874 = vunpack.c.l.b16 %v1698
    %v1875 = vunpack.c.h.b16 %v1698
    %v1876 = vunpack.c.l.b16 %v1699
    %v1877 = vunpack.c.h.b16 %v1699
    %v1878 = vunpack.c.l.b16 %v1700
    %v1879 = vunpack.c.h.b16 %v1700
    %v1880 = vunpack.c.l.b16 %v1701
    %v1881 = vunpack.c.h.b16 %v1701
    %v1882 = vunpack.c.l.b16 %v1702
    %v1883 = vunpack.c.h.b16 %v1702
    %v1884 = vunpack.c.l.b16 %v1703
    %v1885 = vunpack.c.h.b16 %v1703
    %v1886 = vunpack.c.l.b16 %v1704
    %v1887 = vunpack.c.h.b16 %v1704
    %v1888 = vunpack.c.l.b16 %v1705
    %v1889 = vunpack.c.h.b16 %v1705
    %v1890 = vunpack.c.l.b16 %v1706
    %v1891 = vunpack.c.h.b16 %v1706
    %v1892 = vunpack.c.l.b16 %v1707
    %v1893 = vunpack.c.h.b16 %v1707
    %v1894 = vunpack.c.l.b16 %v1708
    %v1895 = vunpack.c.h.b16 %v1708
    %v1896 = vunpack.c.l.b16 %v1709
    %v1897 = vunpack.c.h.b16 %v1709
    %v1898 = vunpack.c.l.b16 %v1710
    %v1899 = vunpack.c.h.b16 %v1710
    %v1900 = vunpack.c.l.b16 %v1711
    %v1901 = vunpack.c.h.b16 %v1711
    %v1902 = vunpack.c.l.b16 %v1712
    %v1903 = vunpack.c.h.b16 %v1712
    %v1904 = vunpack.c.l.b16 %v1713
    %v1905 = vunpack.c.h.b16 %v1713
    %v1906 = vunpack.c.l.b16 %v1714
    %v1907 = vunpack.c.h.b16 %v1714
    %v1908 = vunpack.c.l.b16 %v1715
    %v1909 = vunpack.c.h.b16 %v1715
    %v1910 = vunpack.c.l.b16 %v1716
    %v1911 = vunpack.c.h.b16 %v1716
    %v1912 = vunpack.c.l.b16 %v1717
    %v1913 = vunpack.c.h.b16 %v1717
    %v1914 = vunpack.c.l.b16 %v1718
    %v1915 = vunpack.c.h.b16 %v1718
    %v1916 = vunpack.c.l.b16 %v1719
    %v1917 = vunpack.c.h.b16 %v1719
    %v1918 = vunpack.c.l.b16 %v1720
    %v1919 = vunpack.c.h.b16 %v1720
    %v1920 = vunpack.c.l.b16 %v1721
    %v1921 = vunpack.c.h.b16 %v1721
    %v1922 = vunpack.c.l.b16 %v1722
    %v1923 = vunpack.c.h.b16 %v1722
    %v1924 = vunpack.c.l.b16 %v1723
    %v1925 = vunpack.c.h.b16 %v1723
    %v1926 = vunpack.c.l.b16 %v1724
    %v1927 = vunpack.c.h.b16 %v1724
    %v1928 = vunpack.c.l.b16 %v1725
    %v1929 = vunpack.c.h.b16 %v1725
    %v1930 = vpack.c.b16 %v1804, %v1802
    %v1931 = vpack.c.b16 %v1805, %v1803
    %v1932 = vpack.c.b16 %v1808, %v1806
    %v1933 = vpack.c.b16 %v1809, %v1807
    %v1934 = vpack.c.b16 %v1812, %v1810
    %v1935 = vpack.c.b16 %v1813, %v1811
    %v1936 = vpack.c.b16 %v1816, %v1814
    %v1937 = vpack.c.b16 %v1817, %v1815
    %v1938 = vpack.c.b16 %v1820, %v1818
    %v1939 = vpack.c.b16 %v1821, %v1819
    %v1940 = vpack.c.b16 %v1824, %v1822
    %v1941 = vpack.c.b16 %v1825, %v1823
    %v1942 = vpack.c.b16 %v1828, %v1826
    %v1943 = vpack.c.b16 %v1829, %v1827
    %v1944 = vpack.c.b16 %v1832, %v1830
    %v1945 = vpack.c.b16 %v1833, %v1831
    %v1946 = vpack.c.b16 %v1836, %v1834
    %v1947 = vpack.c.b16 %v1837, %v1835
    %v1948 = vpack.c.b16 %v1840, %v1838
    %v1949 = vpack.c.b16 %v1841, %v1839
    %v1950 = vpack.c.b16 %v1844, %v1842
    %v1951 = vpack.c.b16 %v1845, %v1843
    %v1952 = vpack.c.b16 %v1848, %v1846
    %v1953 = vpack.c.b16 %v1849, %v1847
    %v1954 = vpack.c.b16 %v1852, %v1850
    %v1955 = vpack.c.b16 %v1853, %v1851
    %v1956 = vpack.c.b16 %v1856, %v1854
    %v1957 = vpack.c.b16 %v1857, %v1855
    %v1958 = vpack.c.b16 %v1860, %v1858
    %v1959 = vpack.c.b16 %v1861, %v1859
    %v1960 = vpack.c.b16 %v1864, %v1862
    %v1961 = vpack.c.b16 %v1865, %v1863
    %v1962 = vpack.c.b16 %v1868, %v1866
    %v1963 = vpack.c.b16 %v1869, %v1867
    %v1964 = vpack.c.b16 %v1872, %v1870
    %v1965 = vpack.c.b16 %v1873, %v1871
    %v1966 = vpack.c.b16 %v1876, %v1874
    %v1967 = vpack.c.b16 %v1877, %v1875
    %v1968 = vpack.c.b16 %v1880, %v1878
    %v1969 = vpack.c.b16 %v1881, %v1879
    %v1970 = vpack.c.b16 %v1884, %v1882
    %v1971 = vpack.c.b16 %v1885, %v1883
    %v1972 = vpack.c.b16 %v1888, %v1886
    %v1973 = vpack.c.b16 %v1889, %v1887
    %v1974 = vpack.c.b16 %v1892, %v1890
    %v1975 = vpack.c.b16 %v1893, %v1891
    %v1976 = vpack.c.b16 %v1896, %v1894
    %v1977 = vpack.c.b16 %v1897, %v1895
    %v1978 = vpack.c.b16 %v1900, %v1898
    %v1979 = vpack.c.b16 %v1901, %v1899
    %v1980 = vpack.c.b16 %v1904, %v1902
    %v1981 = vpack.c.b16 %v1905, %v1903
    %v1982 = vpack.c.b16 %v1908, %v1906
    %v1983 = vpack.c.b16 %v1909, %v1907
    %v1984 = vpack.c.b16 %v1912, %v1910
    %v1985 = vpack.c.b16 %v1913, %v1911
    %v1986 = vpack.c.b16 %v1916, %v1914
    %v1987 = vpack.c.b16 %v1917, %v1915
    %v1988 = vpack.c.b16 %v1920, %v1918
    %v1989 = vpack.c.b16 %v1921, %v1919
    %v1990 = vpack.c.b16 %v1924, %v1922
    %v1991 = vpack.c.b16 %v1925, %v1923
    %v1992 = vpack.c.b16 %v1928, %v1926
    %v1993 = vpack.c.b16 %v1929, %v1927
    %2058 = vmatprep.subr.bf16.mxu0 %v1931
    %2059 = vmatpush1.bf16.msra.mxu0 %v1930
    %2060 = vmatprep.subr.bf16.mxu0 %v1933
    %2061 = vmatpush1.bf16.msra.mxu0 %v1932
    %2062 = vmatprep.subr.bf16.mxu0 %v1935
    %2063 = vmatpush1.bf16.msra.mxu0 %v1934
    %2064 = vmatprep.subr.bf16.mxu0 %v1937
    %2065 = vmatpush1.bf16.msra.mxu0 %v1936
    %2066 = vmatprep.subr.bf16.mxu0 %v1939
    %2067 = vmatpush1.bf16.msra.mxu0 %v1938
    %2068 = vmatprep.subr.bf16.mxu0 %v1941
    %2069 = vmatpush1.bf16.msra.mxu0 %v1940
    %2070 = vmatprep.subr.bf16.mxu0 %v1943
    %2071 = vmatpush1.bf16.msra.mxu0 %v1942
    %2072 = vmatprep.subr.bf16.mxu0 %v1945
    %2073 = vmatpush1.bf16.msra.mxu0 %v1944
    %2074 = vmatprep.subr.bf16.mxu0 %v1947
    %2075 = vmatpush1.bf16.msra.mxu0 %v1946
    %2076 = vmatprep.subr.bf16.mxu0 %v1949
    %2077 = vmatpush1.bf16.msra.mxu0 %v1948
    %2078 = vmatprep.subr.bf16.mxu0 %v1951
    %2079 = vmatpush1.bf16.msra.mxu0 %v1950
    %2080 = vmatprep.subr.bf16.mxu0 %v1953
    %2081 = vmatpush1.bf16.msra.mxu0 %v1952
    %2082 = vmatprep.subr.bf16.mxu0 %v1955
    %2083 = vmatpush1.bf16.msra.mxu0 %v1954
    %2084 = vmatprep.subr.bf16.mxu0 %v1957
    %2085 = vmatpush1.bf16.msra.mxu0 %v1956
    %2086 = vmatprep.subr.bf16.mxu0 %v1959
    %2087 = vmatpush1.bf16.msra.mxu0 %v1958
    %2088 = vmatprep.subr.bf16.mxu0 %v1961
    %2089 = vmatpush1.bf16.msra.mxu0 %v1960
    %2090 = vmatprep.mubr.bf16.mxu0 %v1659
    %2091 = vmatmul.mubr.bf16.gmra.mrb[0].mxu0 %v1658
    %v2092 = vpop.f32.mrb[0].mxu0
    %v2093 = vadd.f32 %v1731, %v2092
    %v2094 = vpop.f32.mrb[0].mxu0
    %v2095 = vadd.f32 %v1735, %v2094
    %v2096 = vpop.f32.mrb[0].mxu0
    %v2097 = vadd.f32 %v1731, %v2096
    %v2098 = vpop.f32.mrb[0].mxu0
    %v2099 = vadd.f32 %v1735, %v2098
    %2100 = vdwg.mxu0
    %2101 = vmatprep.subr.bf16.mxu0 %v1963
    %2102 = vmatpush1.bf16.msra.mxu0 %v1962
    %2103 = vmatprep.subr.bf16.mxu0 %v1965
    %2104 = vmatpush1.bf16.msra.mxu0 %v1964
    %2105 = vmatprep.subr.bf16.mxu0 %v1967
    %2106 = vmatpush1.bf16.msra.mxu0 %v1966
    %2107 = vmatprep.subr.bf16.mxu0 %v1969
    %2108 = vmatpush1.bf16.msra.mxu0 %v1968
    %2109 = vmatprep.subr.bf16.mxu0 %v1971
    %2110 = vmatpush1.bf16.msra.mxu0 %v1970
    %2111 = vmatprep.subr.bf16.mxu0 %v1973
    %2112 = vmatpush1.bf16.msra.mxu0 %v1972
    %2113 = vmatprep.subr.bf16.mxu0 %v1975
    %2114 = vmatpush1.bf16.msra.mxu0 %v1974
    %2115 = vmatprep.subr.bf16.mxu0 %v1977
    %2116 = vmatpush1.bf16.msra.mxu0 %v1976
    %2117 = vmatprep.subr.bf16.mxu0 %v1979
    %2118 = vmatpush1.bf16.msra.mxu0 %v1978
    %2119 = vmatprep.subr.bf16.mxu0 %v1981
    %2120 = vmatpush1.bf16.msra.mxu0 %v1980
    %2121 = vmatprep.subr.bf16.mxu0 %v1983
    %2122 = vmatpush1.bf16.msra.mxu0 %v1982
    %2123 = vmatprep.subr.bf16.mxu0 %v1985
    %2124 = vmatpush1.bf16.msra.mxu0 %v1984
    %2125 = vmatprep.subr.bf16.mxu0 %v1987
    %2126 = vmatpush1.bf16.msra.mxu0 %v1986
    %2127 = vmatprep.subr.bf16.mxu0 %v1989
    %2128 = vmatpush1.bf16.msra.mxu0 %v1988
    %2129 = vmatprep.subr.bf16.mxu0 %v1991
    %2130 = vmatpush1.bf16.msra.mxu0 %v1990
    %2131 = vmatprep.subr.bf16.mxu0 %v1993
    %2132 = vmatpush1.bf16.msra.mxu0 %v1992
    %2133 = vmatprep.mubr.bf16.mxu0 %v1661
    %2134 = vmatmul.mubr.bf16.gmra.mrb[0].mxu0 %v1660
    %v2135 = vpop.f32.mrb[0].mxu0
    %v2136 = vadd.f32 %v2093, %v2135
    %v2137 = vpop.f32.mrb[0].mxu0
    %v2138 = vadd.f32 %v2095, %v2137
    %v2139 = vpop.f32.mrb[0].mxu0
    %v2140 = vadd.f32 %v2097, %v2139
    %v2141 = vpop.f32.mrb[0].mxu0
    %v2142 = vadd.f32 %v2099, %v2141
    %2143 = vdwg.mxu0
    %v2144 = vmax.f32 %v2136, 0.0
    %v2145 = vmax.f32 %v2138, 0.0
    %v2146 = vmax.f32 %v2140, 0.0
    %v2147 = vmax.f32 %v2142, 0.0
    %v2148 = vpack.c.bf16 %v2146, %v2144
    %v2149 = vpack.c.bf16 %v2147, %v2145
    %v2150 = vld [vmem:[#allocation4] sm:$0xf]
    %v2151 = vld [vmem:[#allocation4 + $0x4] sm:$0xf]
    %v2152 = vld [vmem:[#allocation4 + $0x8] sm:$0xf]
    %v2153 = vld [vmem:[#allocation4 + $0xc] sm:$0xf]
    %v2154 = vld [vmem:[#allocation4 + $0x10] sm:$0xf]
    %v2155 = vld [vmem:[#allocation4 + $0x14] sm:$0xf]
    %v2156 = vld [vmem:[#allocation4 + $0x18] sm:$0xf]
    %v2157 = vld [vmem:[#allocation4 + $0x1c] sm:$0xf]
    %v2158 = vld [vmem:[#allocation4 + $0x20] sm:$0xf]
    %v2159 = vld [vmem:[#allocation4 + $0x24] sm:$0xf]
    %v2160 = vld [vmem:[#allocation4 + $0x28] sm:$0xf]
    %v2161 = vld [vmem:[#allocation4 + $0x2c] sm:$0xf]
    %v2162 = vld [vmem:[#allocation4 + $0x30] sm:$0xf]
    %v2163 = vld [vmem:[#allocation4 + $0x34] sm:$0xf]
    %v2164 = vld [vmem:[#allocation4 + $0x38] sm:$0xf]
    %v2165 = vld [vmem:[#allocation4 + $0x3c] sm:$0xf]
    %v2166 = vld [vmem:[#allocation4 + $0x40] sm:$0xf]
    %v2167 = vld [vmem:[#allocation4 + $0x44] sm:$0xf]
    %v2168 = vld [vmem:[#allocation4 + $0x48] sm:$0xf]
    %v2169 = vld [vmem:[#allocation4 + $0x4c] sm:$0xf]
    %v2170 = vld [vmem:[#allocation4 + $0x50] sm:$0xf]
    %v2171 = vld [vmem:[#allocation4 + $0x54] sm:$0xf]
    %v2172 = vld [vmem:[#allocation4 + $0x58] sm:$0xf]
    %v2173 = vld [vmem:[#allocation4 + $0x5c] sm:$0xf]
    %v2174 = vld [vmem:[#allocation4 + $0x60] sm:$0xf]
    %v2175 = vld [vmem:[#allocation4 + $0x64] sm:$0xf]
    %v2176 = vld [vmem:[#allocation4 + $0x68] sm:$0xf]
    %v2177 = vld [vmem:[#allocation4 + $0x6c] sm:$0xf]
    %v2178 = vld [vmem:[#allocation4 + $0x70] sm:$0xf]
    %v2179 = vld [vmem:[#allocation4 + $0x74] sm:$0xf]
    %v2180 = vld [vmem:[#allocation4 + $0x78] sm:$0xf]
    %v2181 = vld [vmem:[#allocation4 + $0x7c] sm:$0xf]
    %v2182 = vld [vmem:[%s6] sm:$0x1]
    %v2184 = vlaneseq
    %v2185 = vshrl.u32 %v2184, 7
    %v2186 = vsub.s32 0, %v2185
    %v2187 = vrot.slane %v2182, %v2186
    %v2221 = vunpack.c.l.b16 %v2150
    %v2222 = vunpack.c.l.b16 %v2151
    %v2223 = vunpack.c.l.b16 %v2152
    %v2224 = vunpack.c.l.b16 %v2153
    %v2225 = vunpack.c.l.b16 %v2154
    %v2226 = vunpack.c.l.b16 %v2155
    %v2227 = vunpack.c.l.b16 %v2156
    %v2228 = vunpack.c.l.b16 %v2157
    %v2229 = vunpack.c.l.b16 %v2158
    %v2230 = vunpack.c.l.b16 %v2159
    %v2231 = vunpack.c.l.b16 %v2160
    %v2232 = vunpack.c.l.b16 %v2161
    %v2233 = vunpack.c.l.b16 %v2162
    %v2234 = vunpack.c.l.b16 %v2163
    %v2235 = vunpack.c.l.b16 %v2164
    %v2236 = vunpack.c.l.b16 %v2165
    %v2237 = vunpack.c.l.b16 %v2166
    %v2238 = vunpack.c.l.b16 %v2167
    %v2239 = vunpack.c.l.b16 %v2168
    %v2240 = vunpack.c.l.b16 %v2169
    %v2241 = vunpack.c.l.b16 %v2170
    %v2242 = vunpack.c.l.b16 %v2171
    %v2243 = vunpack.c.l.b16 %v2172
    %v2244 = vunpack.c.l.b16 %v2173
    %v2245 = vunpack.c.l.b16 %v2174
    %v2246 = vunpack.c.l.b16 %v2175
    %v2247 = vunpack.c.l.b16 %v2176
    %v2248 = vunpack.c.l.b16 %v2177
    %v2249 = vunpack.c.l.b16 %v2178
    %v2250 = vunpack.c.l.b16 %v2179
    %v2251 = vunpack.c.l.b16 %v2180
    %v2252 = vunpack.c.l.b16 %v2181
    %v2253 = vpack.c.b16 %v2222, %v2221
    %v2254 = vpack.c.b16 %v2224, %v2223
    %v2255 = vpack.c.b16 %v2226, %v2225
    %v2256 = vpack.c.b16 %v2228, %v2227
    %v2257 = vpack.c.b16 %v2230, %v2229
    %v2258 = vpack.c.b16 %v2232, %v2231
    %v2259 = vpack.c.b16 %v2234, %v2233
    %v2260 = vpack.c.b16 %v2236, %v2235
    %v2261 = vpack.c.b16 %v2238, %v2237
    %v2262 = vpack.c.b16 %v2240, %v2239
    %v2263 = vpack.c.b16 %v2242, %v2241
    %v2264 = vpack.c.b16 %v2244, %v2243
    %v2265 = vpack.c.b16 %v2246, %v2245
    %v2266 = vpack.c.b16 %v2248, %v2247
    %v2267 = vpack.c.b16 %v2250, %v2249
    %v2268 = vpack.c.b16 %v2252, %v2251
    %2285 = vmatprep.subr.bf16.mxu0 0
    %2286 = vmatpush1.bf16.msra.mxu0 %v2253
    %2287 = vmatprep.subr.bf16.mxu0 0
    %2288 = vmatpush1.bf16.msra.mxu0 %v2254
    %2289 = vmatprep.subr.bf16.mxu0 0
    %2290 = vmatpush1.bf16.msra.mxu0 %v2255
    %2291 = vmatprep.subr.bf16.mxu0 0
    %2292 = vmatpush1.bf16.msra.mxu0 %v2256
    %2293 = vmatprep.subr.bf16.mxu0 0
    %2294 = vmatpush1.bf16.msra.mxu0 %v2257
    %2295 = vmatprep.subr.bf16.mxu0 0
    %2296 = vmatpush1.bf16.msra.mxu0 %v2258
    %2297 = vmatprep.subr.bf16.mxu0 0
    %2298 = vmatpush1.bf16.msra.mxu0 %v2259
    %2299 = vmatprep.subr.bf16.mxu0 0
    %2300 = vmatpush1.bf16.msra.mxu0 %v2260
    %2301 = vmatprep.subr.bf16.mxu0 0
    %2302 = vmatpush1.bf16.msra.mxu0 %v2261
    %2303 = vmatprep.subr.bf16.mxu0 0
    %2304 = vmatpush1.bf16.msra.mxu0 %v2262
    %2305 = vmatprep.subr.bf16.mxu0 0
    %2306 = vmatpush1.bf16.msra.mxu0 %v2263
    %2307 = vmatprep.subr.bf16.mxu0 0
    %2308 = vmatpush1.bf16.msra.mxu0 %v2264
    %2309 = vmatprep.subr.bf16.mxu0 0
    %2310 = vmatpush1.bf16.msra.mxu0 %v2265
    %2311 = vmatprep.subr.bf16.mxu0 0
    %2312 = vmatpush1.bf16.msra.mxu0 %v2266
    %2313 = vmatprep.subr.bf16.mxu0 0
    %2314 = vmatpush1.bf16.msra.mxu0 %v2267
    %2315 = vmatprep.subr.bf16.mxu0 0
    %2316 = vmatpush1.bf16.msra.mxu0 %v2268
    %2317 = vmatprep.mubr.bf16.mxu0 %v2149
    %2318 = vmatmul.mubr.bf16.gmra.mrb[0].mxu0 %v2148
    %v2319 = vpop.f32.mrb[0].mxu0
    %v2320 = vadd.f32 %v2187, %v2319
    %v2321 = vpop.f32.mrb[0].mxu0
    %v2322 = vpop.f32.mrb[0].mxu0
    %v2323 = vadd.f32 %v2187, %v2322
    %v2324 = vpop.f32.mrb[0].mxu0
    %2325 = vdwg.mxu0
    %v2326 = vmax.f32 %v2320, 0.0
    %v2327 = vmax.f32 %v2323, 0.0
    %v2328 = vpack.c.bf16 %v2327, %v2326
    %v2329 = vld [vmem:[%s7] sm:$0xf]
    %v2330 = vld [vmem:[%s7 + $0x4] sm:$0xf]
    %v2331 = vld [vmem:[%s7 + $0x8] sm:$0xf]
    %v2332 = vld [vmem:[%s7 + $0xc] sm:$0xf]
    %v2333 = vld [vmem:[%s7 + $0x10] sm:$0xf]
    %v2334 = vld [vmem:[%s7 + $0x14] sm:$0xf]
    %v2335 = vld [vmem:[%s7 + $0x18] sm:$0xf]
    %v2336 = vld [vmem:[%s7 + $0x1c] sm:$0xf]
    %v2337 = vld [vmem:[%s7 + $0x20] sm:$0xf]
    %v2338 = vld [vmem:[%s7 + $0x24] sm:$0xf]
    %v2339 = vld [vmem:[%s7 + $0x28] sm:$0xf]
    %v2340 = vld [vmem:[%s7 + $0x2c] sm:$0xf]
    %v2341 = vld [vmem:[%s7 + $0x30] sm:$0xf]
    %v2342 = vld [vmem:[%s7 + $0x34] sm:$0xf]
    %v2343 = vld [vmem:[%s7 + $0x38] sm:$0xf]
    %v2344 = vld [vmem:[%s7 + $0x3c] sm:$0xf]
    %v2345 = vld [vmem:[%s8] sm:$0x1]
    %v2347 = vlaneseq
    %v2348 = vshrl.u32 %v2347, 7
    %v2349 = vsub.s32 0, %v2348
    %v2350 = vrot.slane %v2345, %v2349
    %v2368 = vunpack.c.l.b16 %v2329
    %v2369 = vunpack.c.l.b16 %v2330
    %v2370 = vunpack.c.l.b16 %v2331
    %v2371 = vunpack.c.l.b16 %v2332
    %v2372 = vunpack.c.l.b16 %v2333
    %v2373 = vunpack.c.l.b16 %v2334
    %v2374 = vunpack.c.l.b16 %v2335
    %v2375 = vunpack.c.l.b16 %v2336
    %v2376 = vunpack.c.l.b16 %v2337
    %v2377 = vunpack.c.l.b16 %v2338
    %v2378 = vunpack.c.l.b16 %v2339
    %v2379 = vunpack.c.l.b16 %v2340
    %v2380 = vunpack.c.l.b16 %v2341
    %v2381 = vunpack.c.l.b16 %v2342
    %v2382 = vunpack.c.l.b16 %v2343
    %v2383 = vunpack.c.l.b16 %v2344
    %v2384 = vpack.c.b16 %v2369, %v2368
    %v2385 = vpack.c.b16 %v2371, %v2370
    %v2386 = vpack.c.b16 %v2373, %v2372
    %v2387 = vpack.c.b16 %v2375, %v2374
    %v2388 = vpack.c.b16 %v2377, %v2376
    %v2389 = vpack.c.b16 %v2379, %v2378
    %v2390 = vpack.c.b16 %v2381, %v2380
    %v2391 = vpack.c.b16 %v2383, %v2382
    %2400 = vmatprep.subr.bf16.mxu0 0
    %2401 = vmatpush1.bf16.msra.mxu0 %v2384
    %2402 = vmatprep.subr.bf16.mxu0 0
    %2403 = vmatpush1.bf16.msra.mxu0 %v2385
    %2404 = vmatprep.subr.bf16.mxu0 0
    %2405 = vmatpush1.bf16.msra.mxu0 %v2386
    %2406 = vmatprep.subr.bf16.mxu0 0
    %2407 = vmatpush1.bf16.msra.mxu0 %v2387
    %2408 = vmatprep.subr.bf16.mxu0 0
    %2409 = vmatpush1.bf16.msra.mxu0 %v2388
    %2410 = vmatprep.subr.bf16.mxu0 0
    %2411 = vmatpush1.bf16.msra.mxu0 %v2389
    %2412 = vmatprep.subr.bf16.mxu0 0
    %2413 = vmatpush1.bf16.msra.mxu0 %v2390
    %2414 = vmatprep.subr.bf16.mxu0 0
    %2415 = vmatpush1.bf16.msra.mxu0 %v2391
    %2416 = vmatprep.subr.bf16.mxu0 0
    %2417 = vmatpush1.bf16.msra.mxu0 0
    %2418 = vmatprep.subr.bf16.mxu0 0
    %2419 = vmatpush1.bf16.msra.mxu0 0
    %2420 = vmatprep.subr.bf16.mxu0 0
    %2421 = vmatpush1.bf16.msra.mxu0 0
    %2422 = vmatprep.subr.bf16.mxu0 0
    %2423 = vmatpush1.bf16.msra.mxu0 0
    %2424 = vmatprep.subr.bf16.mxu0 0
    %2425 = vmatpush1.bf16.msra.mxu0 0
    %2426 = vmatprep.subr.bf16.mxu0 0
    %2427 = vmatpush1.bf16.msra.mxu0 0
    %2428 = vmatprep.subr.bf16.mxu0 0
    %2429 = vmatpush1.bf16.msra.mxu0 0
    %2430 = vmatprep.subr.bf16.mxu0 0
    %2431 = vmatpush1.bf16.msra.mxu0 0
    %2432 = vmatprep.mubr.bf16.mxu0 0
    %2433 = vmatmul.mubr.bf16.gmra.mrb[0].mxu0 %v2328
    %v2434 = vpop.f32.mrb[0].mxu0
    %v2435 = vadd.f32 %v2350, %v2434
    %v2436 = vpop.f32.mrb[0].mxu0
    %v2437 = vpop.f32.mrb[0].mxu0
    %v2438 = vadd.f32 %v2350, %v2437
    %v2439 = vpop.f32.mrb[0].mxu0
    %2440 = vdwg.mxu0
    %2441 = vst [vmem:[%s9] sm:$0xff] %v2435
    %2442 = vst [vmem:[%s9 + $0x8] sm:$0xff] %v2438
    // Predicated region
    $region46: #{densenet_forward.1} parent=1 // pred_check
      _
    $region47: #{densenet_forward.1} parent=1 // pred_check_branch
      %2444 = sbr.rel (0) target = $region49
    $region48: #{densenet_forward.1} parent=1 // pred_region
      _
    $region49: #{densenet_forward.1} parent=1 // pred_fallthru
      _
    // Predicated region
    $region50: #{densenet_forward.1} parent=1 // pred_check
      _
    $region51: #{densenet_forward.1} parent=1 // pred_check_branch
      %2446 = sbr.rel (0) target = $region53
    $region52: #{densenet_forward.1} parent=1 // pred_region
      _
    $region53: #{densenet_forward.1} parent=1 // pred_fallthru
      _
    %2447 = vsyncpa [#allocation3], 1
    %2448 = vsyncpa [#allocation5], 1

</llo_original>
